<compile_context>
chip_gen: v5e
topology: v5e:2x2
jax: 0.10.0
libtpu: 0.0.40
codegen_flags: <defaults>
</compile_context>

<pallas_src>
import jax
import jax.numpy as jnp
from jax.experimental import pallas as pl
from jax.experimental.pallas import tpu as pltpu

H = 64  # nn.LSTM hidden size


def _risk_lstm_kernel(x_ref, wbd_ref, bbd_ref, whh0_ref, w1s_ref, b1_ref,
                      fcw_ref, fcb_ref, out_ref, g0_ref):
    """Whole forward pass in one kernel invocation (everything VMEM-resident).

    x_ref     : (B, T*D)      flattened batch-major input (free bitcast).
    wbd_ref   : (T*D, T*4H)   block-diagonal-over-timesteps W_ih_l0.
    bbd_ref   : (1, T*4H)     fused layer-1 bias tiled over timesteps.
    whh0_ref  : (H, 4H)       layer-1 recurrent weight.
    w1s_ref   : (2H, 4H)      stacked [W_ih_l1; W_hh_l1].
    b1_ref    : (1, 4H)       fused layer-2 bias.
    g0_ref    : (B, T*4H)     VMEM scratch holding layer-1 input projections.
    All gate columns are wrapper-permuted to [i | f | o | g].
    """
    B = out_ref.shape[0]
    Hd = whh0_ref.shape[0]           # hidden size (64)
    Gd = whh0_ref.shape[1]           # 4H (256)
    T = wbd_ref.shape[1] // Gd       # sequence length

    # ---- Off the serial chain: input projection (+ fused bias) for EVERY
    # timestep in one MXU call.  Because wbd is block-diagonal over timesteps,
    # lanes [t*4H : (t+1)*4H] of the result are x[:, t, :] @ W_ih_l0 + b0.
    # Stored to VMEM scratch so no large slab stays live in vregs across the
    # unrolled recurrence; re-read per step as an aligned (B, 4H) lane slice.
    g0_ref[...] = (jnp.dot(x_ref[...], wbd_ref[...],
                           preferred_element_type=jnp.float32)
                   + bbd_ref[...])

    def cell(gates, c):
        # Gate layout [i | f | o | g]: sigmoid on the first 3H lanes only,
        # tanh on the last H only (halves EUP pushes vs. full-slab both).
        sg = jax.nn.sigmoid(gates[:, :3 * Hd])
        g_g = jnp.tanh(gates[:, 3 * Hd:])
        i_g = sg[:, 0 * Hd:1 * Hd]
        f_g = sg[:, 1 * Hd:2 * Hd]
        o_g = sg[:, 2 * Hd:3 * Hd]
        c_new = f_g * c + i_g * g_g
        h_new = o_g * jnp.tanh(c_new)
        return h_new, c_new

    h1 = jnp.zeros((B, Hd), jnp.float32)
    c1 = jnp.zeros((B, Hd), jnp.float32)
    h2 = jnp.zeros((B, Hd), jnp.float32)
    c2 = jnp.zeros((B, Hd), jnp.float32)

    # Wavefront over the two layers: iteration s runs layer-2 for timestep s-1
    # (consuming h1_{s-1} produced in the previous iteration) and layer-1 for
    # timestep s.  Chain length T+1 instead of 2T, and the two cells inside an
    # iteration are independent streams for the scheduler.  T is small and
    # static -> fully unrolled.  Weights are read from refs at point of use.
    for s in range(T + 1):
        if s >= 1:
            # Single fused on-chain matmul: [h1_{s-1} | h2_{s-2}] @ [Wih1;Whh1].
            lhs2 = jnp.concatenate([h1, h2], axis=1)          # (B, 2H) = (8,128)
            g2 = (jnp.dot(lhs2, w1s_ref[...],
                          preferred_element_type=jnp.float32)
                  + b1_ref[...])
            h2, c2 = cell(g2, c2)
        if s < T:
            g1 = (g0_ref[:, s * Gd:(s + 1) * Gd]
                  + jnp.dot(h1, whh0_ref[...],
                            preferred_element_type=jnp.float32))
            h1, c1 = cell(g1, c1)

    # ---- FC head + sigmoid on the last layer-2 hidden state.
    logits = (jnp.dot(h2, fcw_ref[...], preferred_element_type=jnp.float32)
              + fcb_ref[...])
    out_ref[...] = jax.nn.sigmoid(logits)


@jax.jit
def risk_sequence_model(x, packed):
    """x: (B, T, D) float32.  Returns sigmoid(fc(lstm(x)[:, -1, :])) -> (B, O)."""
    B, T, D = x.shape
    wbd, bbd, whh0, w1s, b1, fcw, fcb = packed
    O = fcw.shape[1]
    # Row-major (B,T,D) and (B,T*D) share the same buffer: this reshape is a
    # free bitcast -- no transpose/copy op is dispatched before the kernel.
    x2 = x.reshape(B, T * D)
    # Gridless: the whole working set (~0.4 MiB) is VMEM-resident on every TPU
    # generation (v7x's 64 MiB included); default BlockSpecs map operands in full.
    return pl.pallas_call(
        _risk_lstm_kernel,
        out_shape=jax.ShapeDtypeStruct((B, O), jnp.float32),
        scratch_shapes=[pltpu.VMEM((B, T * 4 * H), jnp.float32)],  # g0 staging
    )(x2, wbd, bbd, whh0, w1s, b1, fcw, fcb)


def _perm_ifog(w):
    """Reorder gate blocks along the last axis: PyTorch [i,f,g,o] -> [i,f,o,g]."""
    i, f, g, o = jnp.split(w, 4, axis=-1)
    return jnp.concatenate([i, f, o, g], axis=-1)


def pack_params(raw, T):
    """Raw PyTorch-layout params -> kernel layout.  One-time, off the hot path
    (the block-diagonal packing depends on the fixed sequence length T)."""
    (w_ih_l0, w_hh_l0, b_ih_l0, b_hh_l0,
     w_ih_l1, w_hh_l1, b_ih_l1, b_hh_l1, fc_w, fc_b) = raw
    D = w_ih_l0.shape[1]

    wih0 = _perm_ifog(jnp.transpose(w_ih_l0))                  # (D, 4H)
    whh0 = _perm_ifog(jnp.transpose(w_hh_l0))                  # (H, 4H)
    b0 = _perm_ifog((b_ih_l0 + b_hh_l0)[None, :])              # (1, 4H)
    wih1 = _perm_ifog(jnp.transpose(w_ih_l1))                  # (H, 4H)
    whh1 = _perm_ifog(jnp.transpose(w_hh_l1))                  # (H, 4H)
    b1 = _perm_ifog((b_ih_l1 + b_hh_l1)[None, :])              # (1, 4H)

    # Block-diagonal layer-1 input weight over timesteps: x.reshape(B, T*D) @
    # wbd places timestep t's gate pre-activations in lanes [t*4H:(t+1)*4H].
    wbd = jnp.zeros((T * D, T * 4 * H), jnp.float32)
    for t in range(T):
        wbd = wbd.at[t * D:(t + 1) * D, t * 4 * H:(t + 1) * 4 * H].set(wih0)
    bbd = jnp.tile(b0, (1, T))                                 # (1, T*4H)

    # Stacked layer-2 weight so [h1 | h2] needs one (B,2H)x(2H,4H) matmul/step.
    w1s = jnp.concatenate([wih1, whh1], axis=0)                # (2H, 4H)

    return (wbd, bbd, whh0, w1s, b1, jnp.transpose(fc_w), fc_b[None, :])


def reference_forward(x, raw):
    """Pure-JAX reference matching torch.nn.LSTM(2 layers, batch_first=True)
    + Linear + Sigmoid, using raw PyTorch-layout parameters."""
    (w_ih_l0, w_hh_l0, b_ih_l0, b_hh_l0,
     w_ih_l1, w_hh_l1, b_ih_l1, b_hh_l1, fc_w, fc_b) = raw
    B, T, D = x.shape

    def cell(inp, h, c, w_ih, w_hh, b_ih, b_hh):
        g = inp @ w_ih.T + h @ w_hh.T + b_ih + b_hh
        i = jax.nn.sigmoid(g[:, 0 * H:1 * H])
        f = jax.nn.sigmoid(g[:, 1 * H:2 * H])
        gg = jnp.tanh(g[:, 2 * H:3 * H])
        o = jax.nn.sigmoid(g[:, 3 * H:4 * H])
        c = f * c + i * gg
        h = o * jnp.tanh(c)
        return h, c

    h1 = jnp.zeros((B, H), jnp.float32)
    c1 = jnp.zeros((B, H), jnp.float32)
    h2 = jnp.zeros((B, H), jnp.float32)
    c2 = jnp.zeros((B, H), jnp.float32)
    for t in range(T):
        h1, c1 = cell(x[:, t, :], h1, c1, w_ih_l0, w_hh_l0, b_ih_l0, b_hh_l0)
        h2, c2 = cell(h1, h2, c2, w_ih_l1, w_hh_l1, b_ih_l1, b_hh_l1)
    return jax.nn.sigmoid(h2 @ fc_w.T + fc_b)


if __name__ == "__main__":
    B, T, D, O = 8, 8, 3, 3   # batch, seq, input_dim, output_dim (hidden=64)

    key = jax.random.PRNGKey(0)
    keys = jax.random.split(key, 11)
    bound = 1.0 / jnp.sqrt(jnp.float32(H))

    def u(k, shape):
        return jax.random.uniform(k, shape, jnp.float32, -bound, bound)

    # PyTorch-native parameter shapes.
    raw = (
        u(keys[0], (4 * H, D)),   # lstm.weight_ih_l0
        u(keys[1], (4 * H, H)),   # lstm.weight_hh_l0
        u(keys[2], (4 * H,)),     # lstm.bias_ih_l0
        u(keys[3], (4 * H,)),     # lstm.bias_hh_l0
        u(keys[4], (4 * H, H)),   # lstm.weight_ih_l1
        u(keys[5], (4 * H, H)),   # lstm.weight_hh_l1
        u(keys[6], (4 * H,)),     # lstm.bias_ih_l1
        u(keys[7], (4 * H,)),     # lstm.bias_hh_l1
        u(keys[8], (O, H)),       # fc.weight
        u(keys[9], (O,)),         # fc.bias
    )
    packed = pack_params(raw, T)

    x = jax.random.normal(keys[10], (B, T, D), jnp.float32)

    y = jax.block_until_ready(risk_sequence_model(x, packed))

    y_ref = reference_forward(x, raw)
    if not jnp.allclose(y, y_ref, atol=1e-3, rtol=1e-3):
        raise AssertionError("Pallas kernel output mismatch vs reference")

    print("KERNEL_OK")
</pallas_src>

<mosaic_0001>
module attributes {stable_mosaic.version = 11 : i64} {
  func.func @_risk_lstm_kernel(%arg0: memref<8x24xf32, #tpu.memory_space<vmem>>, %arg1: memref<24x2048xf32, #tpu.memory_space<vmem>>, %arg2: memref<1x2048xf32, #tpu.memory_space<vmem>>, %arg3: memref<64x256xf32, #tpu.memory_space<vmem>>, %arg4: memref<128x256xf32, #tpu.memory_space<vmem>>, %arg5: memref<1x256xf32, #tpu.memory_space<vmem>>, %arg6: memref<64x3xf32, #tpu.memory_space<vmem>>, %arg7: memref<1x3xf32, #tpu.memory_space<vmem>>, %arg8: memref<8x3xf32, #tpu.memory_space<vmem>>, %arg9: memref<8x2048xf32, #tpu.memory_space<vmem>>) attributes {dimension_semantics = [], scalar_prefetch = 0 : i64, scratch_operands = 1 : i64, tpu.core_type = #tpu.core_type<tc>} {
    %c0 = arith.constant 0 : index
    %c0_0 = arith.constant 0 : index
    %0 = vector.load %arg0[%c0, %c0_0] : memref<8x24xf32, #tpu.memory_space<vmem>>, vector<8x24xf32>
    %c0_1 = arith.constant 0 : index
    %c0_2 = arith.constant 0 : index
    %1 = vector.load %arg1[%c0_1, %c0_2] : memref<24x2048xf32, #tpu.memory_space<vmem>>, vector<24x2048xf32>
    %cst = arith.constant dense<0.000000e+00> : vector<8x2048xf32>
    %2 = tpu.matmul %0, %1, %cst {dimension_numbers = #tpu.dot_dimension_numbers<[1], [0], [0], [1], [0, 0, 1, 1], [], []>} : vector<8x24xf32>, vector<24x2048xf32>, vector<8x2048xf32> -> vector<8x2048xf32>
    %c0_3 = arith.constant 0 : index
    %c0_4 = arith.constant 0 : index
    %3 = vector.load %arg2[%c0_3, %c0_4] : memref<1x2048xf32, #tpu.memory_space<vmem>>, vector<1x2048xf32>
    %4 = vector.broadcast %3 : vector<1x2048xf32> to vector<8x2048xf32>
    %5 = arith.addf %2, %4 : vector<8x2048xf32>
    %c0_5 = arith.constant 0 : index
    %c0_6 = arith.constant 0 : index
    %6 = vector.load %arg9[%c0_5, %c0_6] : memref<8x2048xf32, #tpu.memory_space<vmem>>, vector<8x2048xf32>
    tpu.vector_store %arg9[%c0_5, %c0_6], %5 {strides = array<i32>} : memref<8x2048xf32, #tpu.memory_space<vmem>>, vector<8x2048xf32>,
    %cst_7 = arith.constant 0.000000e+00 : f32
    %7 = vector.broadcast %cst_7 : f32 to vector<8x64xf32>
    %cst_8 = arith.constant 0.000000e+00 : f32
    %8 = vector.broadcast %cst_8 : f32 to vector<8x64xf32>
    %cst_9 = arith.constant 0.000000e+00 : f32
    %9 = vector.broadcast %cst_9 : f32 to vector<8x64xf32>
    %cst_10 = arith.constant 0.000000e+00 : f32
    %10 = vector.broadcast %cst_10 : f32 to vector<8x64xf32>
    %c0_11 = arith.constant 0 : index
    %c0_12 = arith.constant 0 : index
    %11 = vector.load %arg9[%c0_11, %c0_12] : memref<8x2048xf32, #tpu.memory_space<vmem>>, vector<8x256xf32>
    %c0_13 = arith.constant 0 : index
    %c0_14 = arith.constant 0 : index
    %12 = vector.load %arg3[%c0_13, %c0_14] : memref<64x256xf32, #tpu.memory_space<vmem>>, vector<64x256xf32>
    %cst_15 = arith.constant dense<0.000000e+00> : vector<8x256xf32>
    %13 = tpu.matmul %7, %12, %cst_15 {dimension_numbers = #tpu.dot_dimension_numbers<[1], [0], [0], [1], [0, 0, 1, 1], [], []>} : vector<8x64xf32>, vector<64x256xf32>, vector<8x256xf32> -> vector<8x256xf32>
    %14 = arith.addf %11, %13 : vector<8x256xf32>
    %15 = vector.extract_strided_slice %14 {offsets = [0, 0], sizes = [8, 192], strides = [1, 1]} : vector<8x256xf32> to vector<8x192xf32>
    %16 = arith.negf %15 : vector<8x192xf32>
    %17 = math.exp %16 : vector<8x192xf32>
    %cst_16 = arith.constant 1.000000e+00 : f32
    %18 = vector.broadcast %cst_16 : f32 to vector<8x192xf32>
    %19 = arith.addf %18, %17 : vector<8x192xf32>
    %20 = arith.divf %18, %19 : vector<8x192xf32>
    %21 = vector.extract_strided_slice %14 {offsets = [0, 192], sizes = [8, 64], strides = [1, 1]} : vector<8x256xf32> to vector<8x64xf32>
    %22 = math.tanh %21 : vector<8x64xf32>
    %23 = vector.extract_strided_slice %20 {offsets = [0, 0], sizes = [8, 64], strides = [1, 1]} : vector<8x192xf32> to vector<8x64xf32>
    %24 = vector.extract_strided_slice %20 {offsets = [0, 64], sizes = [8, 64], strides = [1, 1]} : vector<8x192xf32> to vector<8x64xf32>
    %25 = vector.extract_strided_slice %20 {offsets = [0, 128], sizes = [8, 64], strides = [1, 1]} : vector<8x192xf32> to vector<8x64xf32>
    %26 = arith.mulf %24, %8 : vector<8x64xf32>
    %27 = arith.mulf %23, %22 : vector<8x64xf32>
    %28 = arith.addf %26, %27 : vector<8x64xf32>
    %29 = math.tanh %28 : vector<8x64xf32>
    %30 = arith.mulf %25, %29 : vector<8x64xf32>
    %31 = tpu.concatenate %30, %9 in 1 : vector<8x64xf32>, vector<8x64xf32> -> vector<8x128xf32>
    %c0_17 = arith.constant 0 : index
    %c0_18 = arith.constant 0 : index
    %32 = vector.load %arg4[%c0_17, %c0_18] : memref<128x256xf32, #tpu.memory_space<vmem>>, vector<128x256xf32>
    %cst_19 = arith.constant dense<0.000000e+00> : vector<8x256xf32>
    %33 = tpu.matmul %31, %32, %cst_19 {dimension_numbers = #tpu.dot_dimension_numbers<[1], [0], [0], [1], [0, 0, 1, 1], [], []>} : vector<8x128xf32>, vector<128x256xf32>, vector<8x256xf32> -> vector<8x256xf32>
    %c0_20 = arith.constant 0 : index
    %c0_21 = arith.constant 0 : index
    %34 = vector.load %arg5[%c0_20, %c0_21] : memref<1x256xf32, #tpu.memory_space<vmem>>, vector<1x256xf32>
    %35 = vector.broadcast %34 : vector<1x256xf32> to vector<8x256xf32>
    %36 = arith.addf %33, %35 : vector<8x256xf32>
    %37 = vector.extract_strided_slice %36 {offsets = [0, 0], sizes = [8, 192], strides = [1, 1]} : vector<8x256xf32> to vector<8x192xf32>
    %38 = arith.negf %37 : vector<8x192xf32>
    %39 = math.exp %38 : vector<8x192xf32>
    %cst_22 = arith.constant 1.000000e+00 : f32
    %40 = vector.broadcast %cst_22 : f32 to vector<8x192xf32>
    %41 = arith.addf %40, %39 : vector<8x192xf32>
    %42 = arith.divf %40, %41 : vector<8x192xf32>
    %43 = vector.extract_strided_slice %36 {offsets = [0, 192], sizes = [8, 64], strides = [1, 1]} : vector<8x256xf32> to vector<8x64xf32>
    %44 = math.tanh %43 : vector<8x64xf32>
    %45 = vector.extract_strided_slice %42 {offsets = [0, 0], sizes = [8, 64], strides = [1, 1]} : vector<8x192xf32> to vector<8x64xf32>
    %46 = vector.extract_strided_slice %42 {offsets = [0, 64], sizes = [8, 64], strides = [1, 1]} : vector<8x192xf32> to vector<8x64xf32>
    %47 = vector.extract_strided_slice %42 {offsets = [0, 128], sizes = [8, 64], strides = [1, 1]} : vector<8x192xf32> to vector<8x64xf32>
    %48 = arith.mulf %46, %10 : vector<8x64xf32>
    %49 = arith.mulf %45, %44 : vector<8x64xf32>
    %50 = arith.addf %48, %49 : vector<8x64xf32>
    %51 = math.tanh %50 : vector<8x64xf32>
    %52 = arith.mulf %47, %51 : vector<8x64xf32>
    %c0_23 = arith.constant 0 : index
    %c256 = arith.constant 256 : index
    %53 = vector.load %arg9[%c0_23, %c256] : memref<8x2048xf32, #tpu.memory_space<vmem>>, vector<8x256xf32>
    %c0_24 = arith.constant 0 : index
    %c0_25 = arith.constant 0 : index
    %54 = vector.load %arg3[%c0_24, %c0_25] : memref<64x256xf32, #tpu.memory_space<vmem>>, vector<64x256xf32>
    %cst_26 = arith.constant dense<0.000000e+00> : vector<8x256xf32>
    %55 = tpu.matmul %30, %54, %cst_26 {dimension_numbers = #tpu.dot_dimension_numbers<[1], [0], [0], [1], [0, 0, 1, 1], [], []>} : vector<8x64xf32>, vector<64x256xf32>, vector<8x256xf32> -> vector<8x256xf32>
    %56 = arith.addf %53, %55 : vector<8x256xf32>
    %57 = vector.extract_strided_slice %56 {offsets = [0, 0], sizes = [8, 192], strides = [1, 1]} : vector<8x256xf32> to vector<8x192xf32>
    %58 = arith.negf %57 : vector<8x192xf32>
    %59 = math.exp %58 : vector<8x192xf32>
    %cst_27 = arith.constant 1.000000e+00 : f32
    %60 = vector.broadcast %cst_27 : f32 to vector<8x192xf32>
    %61 = arith.addf %60, %59 : vector<8x192xf32>
    %62 = arith.divf %60, %61 : vector<8x192xf32>
    %63 = vector.extract_strided_slice %56 {offsets = [0, 192], sizes = [8, 64], strides = [1, 1]} : vector<8x256xf32> to vector<8x64xf32>
    %64 = math.tanh %63 : vector<8x64xf32>
    %65 = vector.extract_strided_slice %62 {offsets = [0, 0], sizes = [8, 64], strides = [1, 1]} : vector<8x192xf32> to vector<8x64xf32>
    %66 = vector.extract_strided_slice %62 {offsets = [0, 64], sizes = [8, 64], strides = [1, 1]} : vector<8x192xf32> to vector<8x64xf32>
    %67 = vector.extract_strided_slice %62 {offsets = [0, 128], sizes = [8, 64], strides = [1, 1]} : vector<8x192xf32> to vector<8x64xf32>
    %68 = arith.mulf %66, %28 : vector<8x64xf32>
    %69 = arith.mulf %65, %64 : vector<8x64xf32>
    %70 = arith.addf %68, %69 : vector<8x64xf32>
    %71 = math.tanh %70 : vector<8x64xf32>
    %72 = arith.mulf %67, %71 : vector<8x64xf32>
    %73 = tpu.concatenate %72, %52 in 1 : vector<8x64xf32>, vector<8x64xf32> -> vector<8x128xf32>
    %c0_28 = arith.constant 0 : index
    %c0_29 = arith.constant 0 : index
    %74 = vector.load %arg4[%c0_28, %c0_29] : memref<128x256xf32, #tpu.memory_space<vmem>>, vector<128x256xf32>
    %cst_30 = arith.constant dense<0.000000e+00> : vector<8x256xf32>
    %75 = tpu.matmul %73, %74, %cst_30 {dimension_numbers = #tpu.dot_dimension_numbers<[1], [0], [0], [1], [0, 0, 1, 1], [], []>} : vector<8x128xf32>, vector<128x256xf32>, vector<8x256xf32> -> vector<8x256xf32>
    %c0_31 = arith.constant 0 : index
    %c0_32 = arith.constant 0 : index
    %76 = vector.load %arg5[%c0_31, %c0_32] : memref<1x256xf32, #tpu.memory_space<vmem>>, vector<1x256xf32>
    %77 = vector.broadcast %76 : vector<1x256xf32> to vector<8x256xf32>
    %78 = arith.addf %75, %77 : vector<8x256xf32>
    %79 = vector.extract_strided_slice %78 {offsets = [0, 0], sizes = [8, 192], strides = [1, 1]} : vector<8x256xf32> to vector<8x192xf32>
    %80 = arith.negf %79 : vector<8x192xf32>
    %81 = math.exp %80 : vector<8x192xf32>
    %cst_33 = arith.constant 1.000000e+00 : f32
    %82 = vector.broadcast %cst_33 : f32 to vector<8x192xf32>
    %83 = arith.addf %82, %81 : vector<8x192xf32>
    %84 = arith.divf %82, %83 : vector<8x192xf32>
    %85 = vector.extract_strided_slice %78 {offsets = [0, 192], sizes = [8, 64], strides = [1, 1]} : vector<8x256xf32> to vector<8x64xf32>
    %86 = math.tanh %85 : vector<8x64xf32>
    %87 = vector.extract_strided_slice %84 {offsets = [0, 0], sizes = [8, 64], strides = [1, 1]} : vector<8x192xf32> to vector<8x64xf32>
    %88 = vector.extract_strided_slice %84 {offsets = [0, 64], sizes = [8, 64], strides = [1, 1]} : vector<8x192xf32> to vector<8x64xf32>
    %89 = vector.extract_strided_slice %84 {offsets = [0, 128], sizes = [8, 64], strides = [1, 1]} : vector<8x192xf32> to vector<8x64xf32>
    %90 = arith.mulf %88, %50 : vector<8x64xf32>
    %91 = arith.mulf %87, %86 : vector<8x64xf32>
    %92 = arith.addf %90, %91 : vector<8x64xf32>
    %93 = math.tanh %92 : vector<8x64xf32>
    %94 = arith.mulf %89, %93 : vector<8x64xf32>
    %c0_34 = arith.constant 0 : index
    %c512 = arith.constant 512 : index
    %95 = vector.load %arg9[%c0_34, %c512] : memref<8x2048xf32, #tpu.memory_space<vmem>>, vector<8x256xf32>
    %c0_35 = arith.constant 0 : index
    %c0_36 = arith.constant 0 : index
    %96 = vector.load %arg3[%c0_35, %c0_36] : memref<64x256xf32, #tpu.memory_space<vmem>>, vector<64x256xf32>
    %cst_37 = arith.constant dense<0.000000e+00> : vector<8x256xf32>
    %97 = tpu.matmul %72, %96, %cst_37 {dimension_numbers = #tpu.dot_dimension_numbers<[1], [0], [0], [1], [0, 0, 1, 1], [], []>} : vector<8x64xf32>, vector<64x256xf32>, vector<8x256xf32> -> vector<8x256xf32>
    %98 = arith.addf %95, %97 : vector<8x256xf32>
    %99 = vector.extract_strided_slice %98 {offsets = [0, 0], sizes = [8, 192], strides = [1, 1]} : vector<8x256xf32> to vector<8x192xf32>
    %100 = arith.negf %99 : vector<8x192xf32>
    %101 = math.exp %100 : vector<8x192xf32>
    %cst_38 = arith.constant 1.000000e+00 : f32
    %102 = vector.broadcast %cst_38 : f32 to vector<8x192xf32>
    %103 = arith.addf %102, %101 : vector<8x192xf32>
    %104 = arith.divf %102, %103 : vector<8x192xf32>
    %105 = vector.extract_strided_slice %98 {offsets = [0, 192], sizes = [8, 64], strides = [1, 1]} : vector<8x256xf32> to vector<8x64xf32>
    %106 = math.tanh %105 : vector<8x64xf32>
    %107 = vector.extract_strided_slice %104 {offsets = [0, 0], sizes = [8, 64], strides = [1, 1]} : vector<8x192xf32> to vector<8x64xf32>
    %108 = vector.extract_strided_slice %104 {offsets = [0, 64], sizes = [8, 64], strides = [1, 1]} : vector<8x192xf32> to vector<8x64xf32>
    %109 = vector.extract_strided_slice %104 {offsets = [0, 128], sizes = [8, 64], strides = [1, 1]} : vector<8x192xf32> to vector<8x64xf32>
    %110 = arith.mulf %108, %70 : vector<8x64xf32>
    %111 = arith.mulf %107, %106 : vector<8x64xf32>
    %112 = arith.addf %110, %111 : vector<8x64xf32>
    %113 = math.tanh %112 : vector<8x64xf32>
    %114 = arith.mulf %109, %113 : vector<8x64xf32>
    %115 = tpu.concatenate %114, %94 in 1 : vector<8x64xf32>, vector<8x64xf32> -> vector<8x128xf32>
    %c0_39 = arith.constant 0 : index
    %c0_40 = arith.constant 0 : index
    %116 = vector.load %arg4[%c0_39, %c0_40] : memref<128x256xf32, #tpu.memory_space<vmem>>, vector<128x256xf32>
    %cst_41 = arith.constant dense<0.000000e+00> : vector<8x256xf32>
    %117 = tpu.matmul %115, %116, %cst_41 {dimension_numbers = #tpu.dot_dimension_numbers<[1], [0], [0], [1], [0, 0, 1, 1], [], []>} : vector<8x128xf32>, vector<128x256xf32>, vector<8x256xf32> -> vector<8x256xf32>
    %c0_42 = arith.constant 0 : index
    %c0_43 = arith.constant 0 : index
    %118 = vector.load %arg5[%c0_42, %c0_43] : memref<1x256xf32, #tpu.memory_space<vmem>>, vector<1x256xf32>
    %119 = vector.broadcast %118 : vector<1x256xf32> to vector<8x256xf32>
    %120 = arith.addf %117, %119 : vector<8x256xf32>
    %121 = vector.extract_strided_slice %120 {offsets = [0, 0], sizes = [8, 192], strides = [1, 1]} : vector<8x256xf32> to vector<8x192xf32>
    %122 = arith.negf %121 : vector<8x192xf32>
    %123 = math.exp %122 : vector<8x192xf32>
    %cst_44 = arith.constant 1.000000e+00 : f32
    %124 = vector.broadcast %cst_44 : f32 to vector<8x192xf32>
    %125 = arith.addf %124, %123 : vector<8x192xf32>
    %126 = arith.divf %124, %125 : vector<8x192xf32>
    %127 = vector.extract_strided_slice %120 {offsets = [0, 192], sizes = [8, 64], strides = [1, 1]} : vector<8x256xf32> to vector<8x64xf32>
    %128 = math.tanh %127 : vector<8x64xf32>
    %129 = vector.extract_strided_slice %126 {offsets = [0, 0], sizes = [8, 64], strides = [1, 1]} : vector<8x192xf32> to vector<8x64xf32>
    %130 = vector.extract_strided_slice %126 {offsets = [0, 64], sizes = [8, 64], strides = [1, 1]} : vector<8x192xf32> to vector<8x64xf32>
    %131 = vector.extract_strided_slice %126 {offsets = [0, 128], sizes = [8, 64], strides = [1, 1]} : vector<8x192xf32> to vector<8x64xf32>
    %132 = arith.mulf %130, %92 : vector<8x64xf32>
    %133 = arith.mulf %129, %128 : vector<8x64xf32>
    %134 = arith.addf %132, %133 : vector<8x64xf32>
    %135 = math.tanh %134 : vector<8x64xf32>
    %136 = arith.mulf %131, %135 : vector<8x64xf32>
    %c0_45 = arith.constant 0 : index
    %c768 = arith.constant 768 : index
    %137 = vector.load %arg9[%c0_45, %c768] : memref<8x2048xf32, #tpu.memory_space<vmem>>, vector<8x256xf32>
    %c0_46 = arith.constant 0 : index
    %c0_47 = arith.constant 0 : index
    %138 = vector.load %arg3[%c0_46, %c0_47] : memref<64x256xf32, #tpu.memory_space<vmem>>, vector<64x256xf32>
    %cst_48 = arith.constant dense<0.000000e+00> : vector<8x256xf32>
    %139 = tpu.matmul %114, %138, %cst_48 {dimension_numbers = #tpu.dot_dimension_numbers<[1], [0], [0], [1], [0, 0, 1, 1], [], []>} : vector<8x64xf32>, vector<64x256xf32>, vector<8x256xf32> -> vector<8x256xf32>
    %140 = arith.addf %137, %139 : vector<8x256xf32>
    %141 = vector.extract_strided_slice %140 {offsets = [0, 0], sizes = [8, 192], strides = [1, 1]} : vector<8x256xf32> to vector<8x192xf32>
    %142 = arith.negf %141 : vector<8x192xf32>
    %143 = math.exp %142 : vector<8x192xf32>
    %cst_49 = arith.constant 1.000000e+00 : f32
    %144 = vector.broadcast %cst_49 : f32 to vector<8x192xf32>
    %145 = arith.addf %144, %143 : vector<8x192xf32>
    %146 = arith.divf %144, %145 : vector<8x192xf32>
    %147 = vector.extract_strided_slice %140 {offsets = [0, 192], sizes = [8, 64], strides = [1, 1]} : vector<8x256xf32> to vector<8x64xf32>
    %148 = math.tanh %147 : vector<8x64xf32>
    %149 = vector.extract_strided_slice %146 {offsets = [0, 0], sizes = [8, 64], strides = [1, 1]} : vector<8x192xf32> to vector<8x64xf32>
    %150 = vector.extract_strided_slice %146 {offsets = [0, 64], sizes = [8, 64], strides = [1, 1]} : vector<8x192xf32> to vector<8x64xf32>
    %151 = vector.extract_strided_slice %146 {offsets = [0, 128], sizes = [8, 64], strides = [1, 1]} : vector<8x192xf32> to vector<8x64xf32>
    %152 = arith.mulf %150, %112 : vector<8x64xf32>
    %153 = arith.mulf %149, %148 : vector<8x64xf32>
    %154 = arith.addf %152, %153 : vector<8x64xf32>
    %155 = math.tanh %154 : vector<8x64xf32>
    %156 = arith.mulf %151, %155 : vector<8x64xf32>
    %157 = tpu.concatenate %156, %136 in 1 : vector<8x64xf32>, vector<8x64xf32> -> vector<8x128xf32>
    %c0_50 = arith.constant 0 : index
    %c0_51 = arith.constant 0 : index
    %158 = vector.load %arg4[%c0_50, %c0_51] : memref<128x256xf32, #tpu.memory_space<vmem>>, vector<128x256xf32>
    %cst_52 = arith.constant dense<0.000000e+00> : vector<8x256xf32>
    %159 = tpu.matmul %157, %158, %cst_52 {dimension_numbers = #tpu.dot_dimension_numbers<[1], [0], [0], [1], [0, 0, 1, 1], [], []>} : vector<8x128xf32>, vector<128x256xf32>, vector<8x256xf32> -> vector<8x256xf32>
    %c0_53 = arith.constant 0 : index
    %c0_54 = arith.constant 0 : index
    %160 = vector.load %arg5[%c0_53, %c0_54] : memref<1x256xf32, #tpu.memory_space<vmem>>, vector<1x256xf32>
    %161 = vector.broadcast %160 : vector<1x256xf32> to vector<8x256xf32>
    %162 = arith.addf %159, %161 : vector<8x256xf32>
    %163 = vector.extract_strided_slice %162 {offsets = [0, 0], sizes = [8, 192], strides = [1, 1]} : vector<8x256xf32> to vector<8x192xf32>
    %164 = arith.negf %163 : vector<8x192xf32>
    %165 = math.exp %164 : vector<8x192xf32>
    %cst_55 = arith.constant 1.000000e+00 : f32
    %166 = vector.broadcast %cst_55 : f32 to vector<8x192xf32>
    %167 = arith.addf %166, %165 : vector<8x192xf32>
    %168 = arith.divf %166, %167 : vector<8x192xf32>
    %169 = vector.extract_strided_slice %162 {offsets = [0, 192], sizes = [8, 64], strides = [1, 1]} : vector<8x256xf32> to vector<8x64xf32>
    %170 = math.tanh %169 : vector<8x64xf32>
    %171 = vector.extract_strided_slice %168 {offsets = [0, 0], sizes = [8, 64], strides = [1, 1]} : vector<8x192xf32> to vector<8x64xf32>
    %172 = vector.extract_strided_slice %168 {offsets = [0, 64], sizes = [8, 64], strides = [1, 1]} : vector<8x192xf32> to vector<8x64xf32>
    %173 = vector.extract_strided_slice %168 {offsets = [0, 128], sizes = [8, 64], strides = [1, 1]} : vector<8x192xf32> to vector<8x64xf32>
    %174 = arith.mulf %172, %134 : vector<8x64xf32>
    %175 = arith.mulf %171, %170 : vector<8x64xf32>
    %176 = arith.addf %174, %175 : vector<8x64xf32>
    %177 = math.tanh %176 : vector<8x64xf32>
    %178 = arith.mulf %173, %177 : vector<8x64xf32>
    %c0_56 = arith.constant 0 : index
    %c1024 = arith.constant 1024 : index
    %179 = vector.load %arg9[%c0_56, %c1024] : memref<8x2048xf32, #tpu.memory_space<vmem>>, vector<8x256xf32>
    %c0_57 = arith.constant 0 : index
    %c0_58 = arith.constant 0 : index
    %180 = vector.load %arg3[%c0_57, %c0_58] : memref<64x256xf32, #tpu.memory_space<vmem>>, vector<64x256xf32>
    %cst_59 = arith.constant dense<0.000000e+00> : vector<8x256xf32>
    %181 = tpu.matmul %156, %180, %cst_59 {dimension_numbers = #tpu.dot_dimension_numbers<[1], [0], [0], [1], [0, 0, 1, 1], [], []>} : vector<8x64xf32>, vector<64x256xf32>, vector<8x256xf32> -> vector<8x256xf32>
    %182 = arith.addf %179, %181 : vector<8x256xf32>
    %183 = vector.extract_strided_slice %182 {offsets = [0, 0], sizes = [8, 192], strides = [1, 1]} : vector<8x256xf32> to vector<8x192xf32>
    %184 = arith.negf %183 : vector<8x192xf32>
    %185 = math.exp %184 : vector<8x192xf32>
    %cst_60 = arith.constant 1.000000e+00 : f32
    %186 = vector.broadcast %cst_60 : f32 to vector<8x192xf32>
    %187 = arith.addf %186, %185 : vector<8x192xf32>
    %188 = arith.divf %186, %187 : vector<8x192xf32>
    %189 = vector.extract_strided_slice %182 {offsets = [0, 192], sizes = [8, 64], strides = [1, 1]} : vector<8x256xf32> to vector<8x64xf32>
    %190 = math.tanh %189 : vector<8x64xf32>
    %191 = vector.extract_strided_slice %188 {offsets = [0, 0], sizes = [8, 64], strides = [1, 1]} : vector<8x192xf32> to vector<8x64xf32>
    %192 = vector.extract_strided_slice %188 {offsets = [0, 64], sizes = [8, 64], strides = [1, 1]} : vector<8x192xf32> to vector<8x64xf32>
    %193 = vector.extract_strided_slice %188 {offsets = [0, 128], sizes = [8, 64], strides = [1, 1]} : vector<8x192xf32> to vector<8x64xf32>
    %194 = arith.mulf %192, %154 : vector<8x64xf32>
    %195 = arith.mulf %191, %190 : vector<8x64xf32>
    %196 = arith.addf %194, %195 : vector<8x64xf32>
    %197 = math.tanh %196 : vector<8x64xf32>
    %198 = arith.mulf %193, %197 : vector<8x64xf32>
    %199 = tpu.concatenate %198, %178 in 1 : vector<8x64xf32>, vector<8x64xf32> -> vector<8x128xf32>
    %c0_61 = arith.constant 0 : index
    %c0_62 = arith.constant 0 : index
    %200 = vector.load %arg4[%c0_61, %c0_62] : memref<128x256xf32, #tpu.memory_space<vmem>>, vector<128x256xf32>
    %cst_63 = arith.constant dense<0.000000e+00> : vector<8x256xf32>
    %201 = tpu.matmul %199, %200, %cst_63 {dimension_numbers = #tpu.dot_dimension_numbers<[1], [0], [0], [1], [0, 0, 1, 1], [], []>} : vector<8x128xf32>, vector<128x256xf32>, vector<8x256xf32> -> vector<8x256xf32>
    %c0_64 = arith.constant 0 : index
    %c0_65 = arith.constant 0 : index
    %202 = vector.load %arg5[%c0_64, %c0_65] : memref<1x256xf32, #tpu.memory_space<vmem>>, vector<1x256xf32>
    %203 = vector.broadcast %202 : vector<1x256xf32> to vector<8x256xf32>
    %204 = arith.addf %201, %203 : vector<8x256xf32>
    %205 = vector.extract_strided_slice %204 {offsets = [0, 0], sizes = [8, 192], strides = [1, 1]} : vector<8x256xf32> to vector<8x192xf32>
    %206 = arith.negf %205 : vector<8x192xf32>
    %207 = math.exp %206 : vector<8x192xf32>
    %cst_66 = arith.constant 1.000000e+00 : f32
    %208 = vector.broadcast %cst_66 : f32 to vector<8x192xf32>
    %209 = arith.addf %208, %207 : vector<8x192xf32>
    %210 = arith.divf %208, %209 : vector<8x192xf32>
    %211 = vector.extract_strided_slice %204 {offsets = [0, 192], sizes = [8, 64], strides = [1, 1]} : vector<8x256xf32> to vector<8x64xf32>
    %212 = math.tanh %211 : vector<8x64xf32>
    %213 = vector.extract_strided_slice %210 {offsets = [0, 0], sizes = [8, 64], strides = [1, 1]} : vector<8x192xf32> to vector<8x64xf32>
    %214 = vector.extract_strided_slice %210 {offsets = [0, 64], sizes = [8, 64], strides = [1, 1]} : vector<8x192xf32> to vector<8x64xf32>
    %215 = vector.extract_strided_slice %210 {offsets = [0, 128], sizes = [8, 64], strides = [1, 1]} : vector<8x192xf32> to vector<8x64xf32>
    %216 = arith.mulf %214, %176 : vector<8x64xf32>
    %217 = arith.mulf %213, %212 : vector<8x64xf32>
    %218 = arith.addf %216, %217 : vector<8x64xf32>
    %219 = math.tanh %218 : vector<8x64xf32>
    %220 = arith.mulf %215, %219 : vector<8x64xf32>
    %c0_67 = arith.constant 0 : index
    %c1280 = arith.constant 1280 : index
    %221 = vector.load %arg9[%c0_67, %c1280] : memref<8x2048xf32, #tpu.memory_space<vmem>>, vector<8x256xf32>
    %c0_68 = arith.constant 0 : index
    %c0_69 = arith.constant 0 : index
    %222 = vector.load %arg3[%c0_68, %c0_69] : memref<64x256xf32, #tpu.memory_space<vmem>>, vector<64x256xf32>
    %cst_70 = arith.constant dense<0.000000e+00> : vector<8x256xf32>
    %223 = tpu.matmul %198, %222, %cst_70 {dimension_numbers = #tpu.dot_dimension_numbers<[1], [0], [0], [1], [0, 0, 1, 1], [], []>} : vector<8x64xf32>, vector<64x256xf32>, vector<8x256xf32> -> vector<8x256xf32>
    %224 = arith.addf %221, %223 : vector<8x256xf32>
    %225 = vector.extract_strided_slice %224 {offsets = [0, 0], sizes = [8, 192], strides = [1, 1]} : vector<8x256xf32> to vector<8x192xf32>
    %226 = arith.negf %225 : vector<8x192xf32>
    %227 = math.exp %226 : vector<8x192xf32>
    %cst_71 = arith.constant 1.000000e+00 : f32
    %228 = vector.broadcast %cst_71 : f32 to vector<8x192xf32>
    %229 = arith.addf %228, %227 : vector<8x192xf32>
    %230 = arith.divf %228, %229 : vector<8x192xf32>
    %231 = vector.extract_strided_slice %224 {offsets = [0, 192], sizes = [8, 64], strides = [1, 1]} : vector<8x256xf32> to vector<8x64xf32>
    %232 = math.tanh %231 : vector<8x64xf32>
    %233 = vector.extract_strided_slice %230 {offsets = [0, 0], sizes = [8, 64], strides = [1, 1]} : vector<8x192xf32> to vector<8x64xf32>
    %234 = vector.extract_strided_slice %230 {offsets = [0, 64], sizes = [8, 64], strides = [1, 1]} : vector<8x192xf32> to vector<8x64xf32>
    %235 = vector.extract_strided_slice %230 {offsets = [0, 128], sizes = [8, 64], strides = [1, 1]} : vector<8x192xf32> to vector<8x64xf32>
    %236 = arith.mulf %234, %196 : vector<8x64xf32>
    %237 = arith.mulf %233, %232 : vector<8x64xf32>
    %238 = arith.addf %236, %237 : vector<8x64xf32>
    %239 = math.tanh %238 : vector<8x64xf32>
    %240 = arith.mulf %235, %239 : vector<8x64xf32>
    %241 = tpu.concatenate %240, %220 in 1 : vector<8x64xf32>, vector<8x64xf32> -> vector<8x128xf32>
    %c0_72 = arith.constant 0 : index
    %c0_73 = arith.constant 0 : index
    %242 = vector.load %arg4[%c0_72, %c0_73] : memref<128x256xf32, #tpu.memory_space<vmem>>, vector<128x256xf32>
    %cst_74 = arith.constant dense<0.000000e+00> : vector<8x256xf32>
    %243 = tpu.matmul %241, %242, %cst_74 {dimension_numbers = #tpu.dot_dimension_numbers<[1], [0], [0], [1], [0, 0, 1, 1], [], []>} : vector<8x128xf32>, vector<128x256xf32>, vector<8x256xf32> -> vector<8x256xf32>
    %c0_75 = arith.constant 0 : index
    %c0_76 = arith.constant 0 : index
    %244 = vector.load %arg5[%c0_75, %c0_76] : memref<1x256xf32, #tpu.memory_space<vmem>>, vector<1x256xf32>
    %245 = vector.broadcast %244 : vector<1x256xf32> to vector<8x256xf32>
    %246 = arith.addf %243, %245 : vector<8x256xf32>
    %247 = vector.extract_strided_slice %246 {offsets = [0, 0], sizes = [8, 192], strides = [1, 1]} : vector<8x256xf32> to vector<8x192xf32>
    %248 = arith.negf %247 : vector<8x192xf32>
    %249 = math.exp %248 : vector<8x192xf32>
    %cst_77 = arith.constant 1.000000e+00 : f32
    %250 = vector.broadcast %cst_77 : f32 to vector<8x192xf32>
    %251 = arith.addf %250, %249 : vector<8x192xf32>
    %252 = arith.divf %250, %251 : vector<8x192xf32>
    %253 = vector.extract_strided_slice %246 {offsets = [0, 192], sizes = [8, 64], strides = [1, 1]} : vector<8x256xf32> to vector<8x64xf32>
    %254 = math.tanh %253 : vector<8x64xf32>
    %255 = vector.extract_strided_slice %252 {offsets = [0, 0], sizes = [8, 64], strides = [1, 1]} : vector<8x192xf32> to vector<8x64xf32>
    %256 = vector.extract_strided_slice %252 {offsets = [0, 64], sizes = [8, 64], strides = [1, 1]} : vector<8x192xf32> to vector<8x64xf32>
    %257 = vector.extract_strided_slice %252 {offsets = [0, 128], sizes = [8, 64], strides = [1, 1]} : vector<8x192xf32> to vector<8x64xf32>
    %258 = arith.mulf %256, %218 : vector<8x64xf32>
    %259 = arith.mulf %255, %254 : vector<8x64xf32>
    %260 = arith.addf %258, %259 : vector<8x64xf32>
    %261 = math.tanh %260 : vector<8x64xf32>
    %262 = arith.mulf %257, %261 : vector<8x64xf32>
    %c0_78 = arith.constant 0 : index
    %c1536 = arith.constant 1536 : index
    %263 = vector.load %arg9[%c0_78, %c1536] : memref<8x2048xf32, #tpu.memory_space<vmem>>, vector<8x256xf32>
    %c0_79 = arith.constant 0 : index
    %c0_80 = arith.constant 0 : index
    %264 = vector.load %arg3[%c0_79, %c0_80] : memref<64x256xf32, #tpu.memory_space<vmem>>, vector<64x256xf32>
    %cst_81 = arith.constant dense<0.000000e+00> : vector<8x256xf32>
    %265 = tpu.matmul %240, %264, %cst_81 {dimension_numbers = #tpu.dot_dimension_numbers<[1], [0], [0], [1], [0, 0, 1, 1], [], []>} : vector<8x64xf32>, vector<64x256xf32>, vector<8x256xf32> -> vector<8x256xf32>
    %266 = arith.addf %263, %265 : vector<8x256xf32>
    %267 = vector.extract_strided_slice %266 {offsets = [0, 0], sizes = [8, 192], strides = [1, 1]} : vector<8x256xf32> to vector<8x192xf32>
    %268 = arith.negf %267 : vector<8x192xf32>
    %269 = math.exp %268 : vector<8x192xf32>
    %cst_82 = arith.constant 1.000000e+00 : f32
    %270 = vector.broadcast %cst_82 : f32 to vector<8x192xf32>
    %271 = arith.addf %270, %269 : vector<8x192xf32>
    %272 = arith.divf %270, %271 : vector<8x192xf32>
    %273 = vector.extract_strided_slice %266 {offsets = [0, 192], sizes = [8, 64], strides = [1, 1]} : vector<8x256xf32> to vector<8x64xf32>
    %274 = math.tanh %273 : vector<8x64xf32>
    %275 = vector.extract_strided_slice %272 {offsets = [0, 0], sizes = [8, 64], strides = [1, 1]} : vector<8x192xf32> to vector<8x64xf32>
    %276 = vector.extract_strided_slice %272 {offsets = [0, 64], sizes = [8, 64], strides = [1, 1]} : vector<8x192xf32> to vector<8x64xf32>
    %277 = vector.extract_strided_slice %272 {offsets = [0, 128], sizes = [8, 64], strides = [1, 1]} : vector<8x192xf32> to vector<8x64xf32>
    %278 = arith.mulf %276, %238 : vector<8x64xf32>
    %279 = arith.mulf %275, %274 : vector<8x64xf32>
    %280 = arith.addf %278, %279 : vector<8x64xf32>
    %281 = math.tanh %280 : vector<8x64xf32>
    %282 = arith.mulf %277, %281 : vector<8x64xf32>
    %283 = tpu.concatenate %282, %262 in 1 : vector<8x64xf32>, vector<8x64xf32> -> vector<8x128xf32>
    %c0_83 = arith.constant 0 : index
    %c0_84 = arith.constant 0 : index
    %284 = vector.load %arg4[%c0_83, %c0_84] : memref<128x256xf32, #tpu.memory_space<vmem>>, vector<128x256xf32>
    %cst_85 = arith.constant dense<0.000000e+00> : vector<8x256xf32>
    %285 = tpu.matmul %283, %284, %cst_85 {dimension_numbers = #tpu.dot_dimension_numbers<[1], [0], [0], [1], [0, 0, 1, 1], [], []>} : vector<8x128xf32>, vector<128x256xf32>, vector<8x256xf32> -> vector<8x256xf32>
    %c0_86 = arith.constant 0 : index
    %c0_87 = arith.constant 0 : index
    %286 = vector.load %arg5[%c0_86, %c0_87] : memref<1x256xf32, #tpu.memory_space<vmem>>, vector<1x256xf32>
    %287 = vector.broadcast %286 : vector<1x256xf32> to vector<8x256xf32>
    %288 = arith.addf %285, %287 : vector<8x256xf32>
    %289 = vector.extract_strided_slice %288 {offsets = [0, 0], sizes = [8, 192], strides = [1, 1]} : vector<8x256xf32> to vector<8x192xf32>
    %290 = arith.negf %289 : vector<8x192xf32>
    %291 = math.exp %290 : vector<8x192xf32>
    %cst_88 = arith.constant 1.000000e+00 : f32
    %292 = vector.broadcast %cst_88 : f32 to vector<8x192xf32>
    %293 = arith.addf %292, %291 : vector<8x192xf32>
    %294 = arith.divf %292, %293 : vector<8x192xf32>
    %295 = vector.extract_strided_slice %288 {offsets = [0, 192], sizes = [8, 64], strides = [1, 1]} : vector<8x256xf32> to vector<8x64xf32>
    %296 = math.tanh %295 : vector<8x64xf32>
    %297 = vector.extract_strided_slice %294 {offsets = [0, 0], sizes = [8, 64], strides = [1, 1]} : vector<8x192xf32> to vector<8x64xf32>
    %298 = vector.extract_strided_slice %294 {offsets = [0, 64], sizes = [8, 64], strides = [1, 1]} : vector<8x192xf32> to vector<8x64xf32>
    %299 = vector.extract_strided_slice %294 {offsets = [0, 128], sizes = [8, 64], strides = [1, 1]} : vector<8x192xf32> to vector<8x64xf32>
    %300 = arith.mulf %298, %260 : vector<8x64xf32>
    %301 = arith.mulf %297, %296 : vector<8x64xf32>
    %302 = arith.addf %300, %301 : vector<8x64xf32>
    %303 = math.tanh %302 : vector<8x64xf32>
    %304 = arith.mulf %299, %303 : vector<8x64xf32>
    %c0_89 = arith.constant 0 : index
    %c1792 = arith.constant 1792 : index
    %305 = vector.load %arg9[%c0_89, %c1792] : memref<8x2048xf32, #tpu.memory_space<vmem>>, vector<8x256xf32>
    %c0_90 = arith.constant 0 : index
    %c0_91 = arith.constant 0 : index
    %306 = vector.load %arg3[%c0_90, %c0_91] : memref<64x256xf32, #tpu.memory_space<vmem>>, vector<64x256xf32>
    %cst_92 = arith.constant dense<0.000000e+00> : vector<8x256xf32>
    %307 = tpu.matmul %282, %306, %cst_92 {dimension_numbers = #tpu.dot_dimension_numbers<[1], [0], [0], [1], [0, 0, 1, 1], [], []>} : vector<8x64xf32>, vector<64x256xf32>, vector<8x256xf32> -> vector<8x256xf32>
    %308 = arith.addf %305, %307 : vector<8x256xf32>
    %309 = vector.extract_strided_slice %308 {offsets = [0, 0], sizes = [8, 192], strides = [1, 1]} : vector<8x256xf32> to vector<8x192xf32>
    %310 = arith.negf %309 : vector<8x192xf32>
    %311 = math.exp %310 : vector<8x192xf32>
    %cst_93 = arith.constant 1.000000e+00 : f32
    %312 = vector.broadcast %cst_93 : f32 to vector<8x192xf32>
    %313 = arith.addf %312, %311 : vector<8x192xf32>
    %314 = arith.divf %312, %313 : vector<8x192xf32>
    %315 = vector.extract_strided_slice %308 {offsets = [0, 192], sizes = [8, 64], strides = [1, 1]} : vector<8x256xf32> to vector<8x64xf32>
    %316 = math.tanh %315 : vector<8x64xf32>
    %317 = vector.extract_strided_slice %314 {offsets = [0, 0], sizes = [8, 64], strides = [1, 1]} : vector<8x192xf32> to vector<8x64xf32>
    %318 = vector.extract_strided_slice %314 {offsets = [0, 64], sizes = [8, 64], strides = [1, 1]} : vector<8x192xf32> to vector<8x64xf32>
    %319 = vector.extract_strided_slice %314 {offsets = [0, 128], sizes = [8, 64], strides = [1, 1]} : vector<8x192xf32> to vector<8x64xf32>
    %320 = arith.mulf %318, %280 : vector<8x64xf32>
    %321 = arith.mulf %317, %316 : vector<8x64xf32>
    %322 = arith.addf %320, %321 : vector<8x64xf32>
    %323 = math.tanh %322 : vector<8x64xf32>
    %324 = arith.mulf %319, %323 : vector<8x64xf32>
    %325 = tpu.concatenate %324, %304 in 1 : vector<8x64xf32>, vector<8x64xf32> -> vector<8x128xf32>
    %c0_94 = arith.constant 0 : index
    %c0_95 = arith.constant 0 : index
    %326 = vector.load %arg4[%c0_94, %c0_95] : memref<128x256xf32, #tpu.memory_space<vmem>>, vector<128x256xf32>
    %cst_96 = arith.constant dense<0.000000e+00> : vector<8x256xf32>
    %327 = tpu.matmul %325, %326, %cst_96 {dimension_numbers = #tpu.dot_dimension_numbers<[1], [0], [0], [1], [0, 0, 1, 1], [], []>} : vector<8x128xf32>, vector<128x256xf32>, vector<8x256xf32> -> vector<8x256xf32>
    %c0_97 = arith.constant 0 : index
    %c0_98 = arith.constant 0 : index
    %328 = vector.load %arg5[%c0_97, %c0_98] : memref<1x256xf32, #tpu.memory_space<vmem>>, vector<1x256xf32>
    %329 = vector.broadcast %328 : vector<1x256xf32> to vector<8x256xf32>
    %330 = arith.addf %327, %329 : vector<8x256xf32>
    %331 = vector.extract_strided_slice %330 {offsets = [0, 0], sizes = [8, 192], strides = [1, 1]} : vector<8x256xf32> to vector<8x192xf32>
    %332 = arith.negf %331 : vector<8x192xf32>
    %333 = math.exp %332 : vector<8x192xf32>
    %cst_99 = arith.constant 1.000000e+00 : f32
    %334 = vector.broadcast %cst_99 : f32 to vector<8x192xf32>
    %335 = arith.addf %334, %333 : vector<8x192xf32>
    %336 = arith.divf %334, %335 : vector<8x192xf32>
    %337 = vector.extract_strided_slice %330 {offsets = [0, 192], sizes = [8, 64], strides = [1, 1]} : vector<8x256xf32> to vector<8x64xf32>
    %338 = math.tanh %337 : vector<8x64xf32>
    %339 = vector.extract_strided_slice %336 {offsets = [0, 0], sizes = [8, 64], strides = [1, 1]} : vector<8x192xf32> to vector<8x64xf32>
    %340 = vector.extract_strided_slice %336 {offsets = [0, 64], sizes = [8, 64], strides = [1, 1]} : vector<8x192xf32> to vector<8x64xf32>
    %341 = vector.extract_strided_slice %336 {offsets = [0, 128], sizes = [8, 64], strides = [1, 1]} : vector<8x192xf32> to vector<8x64xf32>
    %342 = arith.mulf %340, %302 : vector<8x64xf32>
    %343 = arith.mulf %339, %338 : vector<8x64xf32>
    %344 = arith.addf %342, %343 : vector<8x64xf32>
    %345 = math.tanh %344 : vector<8x64xf32>
    %346 = arith.mulf %341, %345 : vector<8x64xf32>
    %c0_100 = arith.constant 0 : index
    %c0_101 = arith.constant 0 : index
    %347 = vector.load %arg6[%c0_100, %c0_101] : memref<64x3xf32, #tpu.memory_space<vmem>>, vector<64x3xf32>
    %cst_102 = arith.constant dense<0.000000e+00> : vector<8x3xf32>
    %348 = tpu.matmul %346, %347, %cst_102 {dimension_numbers = #tpu.dot_dimension_numbers<[1], [0], [0], [1], [0, 0, 1, 1], [], []>} : vector<8x64xf32>, vector<64x3xf32>, vector<8x3xf32> -> vector<8x3xf32>
    %c0_103 = arith.constant 0 : index
    %c0_104 = arith.constant 0 : index
    %349 = vector.load %arg7[%c0_103, %c0_104] : memref<1x3xf32, #tpu.memory_space<vmem>>, vector<1x3xf32>
    %350 = vector.broadcast %349 : vector<1x3xf32> to vector<8x3xf32>
    %351 = arith.addf %348, %350 : vector<8x3xf32>
    %352 = arith.negf %351 : vector<8x3xf32>
    %353 = math.exp %352 : vector<8x3xf32>
    %cst_105 = arith.constant 1.000000e+00 : f32
    %354 = vector.broadcast %cst_105 : f32 to vector<8x3xf32>
    %355 = arith.addf %354, %353 : vector<8x3xf32>
    %356 = arith.divf %354, %355 : vector<8x3xf32>
    %c0_106 = arith.constant 0 : index
    %c0_107 = arith.constant 0 : index
    %357 = vector.load %arg8[%c0_106, %c0_107] : memref<8x3xf32, #tpu.memory_space<vmem>>, vector<8x3xf32>
    tpu.vector_store %arg8[%c0_106, %c0_107], %356 {strides = array<i32>} : memref<8x3xf32, #tpu.memory_space<vmem>>, vector<8x3xf32>,
    return
  }
}

</mosaic_0001>

<llo_original>
// kernel: risk_sequence_model.1
$region0: #{risk_sequence_model.1}
  #allocation0 [shape = 'u32[]', space=smem, size = 0x4, offset = 0x4, fixed_abs, tag = 'smem constant byte address 0x4 - core index']
  #allocation1 [shape = 'u32[72,128]{1,0:T(1,128)}', space=vmem, size = 0x9000, scoped, tag = 'internal scratch']
  #allocation2 [shape = 'f32[8,2048]{1,0:T(8,128)}', space=vmem, size = 0x10000, scoped, tag = 'scratch operand']
  %s0 = inlined_call_operand.vmem [shape: f32[8,24], index: 0, kind: input, shape index: {}]
  %s1 = inlined_call_operand.hbm [shape: f32[24,2048], index: 1, kind: input, shape index: {}]
  %s2 = inlined_call_operand.vmem [shape: f32[1,2048], index: 2, kind: input, shape index: {}]
  %s3 = inlined_call_operand.vmem [shape: f32[64,256], index: 3, kind: input, shape index: {}]
  %s4 = inlined_call_operand.hbm [shape: f32[128,256], index: 4, kind: input, shape index: {}]
  %s5 = inlined_call_operand.vmem [shape: f32[1,256], index: 5, kind: input, shape index: {}]
  %s6 = inlined_call_operand.vmem [shape: f32[64,3], index: 6, kind: input, shape index: {}]
  %s7 = inlined_call_operand.vmem [shape: f32[1,3], index: 7, kind: input, shape index: {}]
  %s8 = inlined_call_operand.vmem [shape: f32[8,3], index: 8, kind: output, shape index: {}]
  %s9 = sld [smem:[#allocation0]]
  $region50: #{risk_sequence_model.1} parent=0
    _
  %s11 = ssub.s32 1, %s9
  %s12 = scalar_select 0, %s11, %s9
  $region1: #{risk_sequence_model.1} parent=0
    #allocation3 [shape = 'u8[196608]{0}', space=vmem, size = 0x30000, scoped, tag = 'input window, operand 1, single buffered']
    #allocation4 [shape = 's32[1]{0}', space=sflag, size = 0x4, scoped, tag = 'scoped memory for risk_sequence_model.1']
    #allocation5 [shape = 'u8[131072]{0}', space=vmem, size = 0x20000, scoped, tag = 'input window, operand 4, single buffered']
    #allocation6 [shape = 's32[1]{0}', space=sflag, size = 0x4, scoped, tag = 'scoped memory for risk_sequence_model.1']
    %13 = vsyncpa [#allocation4], 0
    %14 = vsyncpa [#allocation6], 0
    // Predicated region
    $region2: #{risk_sequence_model.1} parent=1 // pred_check
      _
    $region3: #{risk_sequence_model.1} parent=1 // pred_check_branch
      %16 = sbr.rel (0) target = $region5
    $region4: #{risk_sequence_model.1} parent=1 // pred_region
      _
    $region5: #{risk_sequence_model.1} parent=1 // pred_fallthru
      _
    // Predicated region
    $region6: #{risk_sequence_model.1} parent=1 // pred_check
      _
    $region7: #{risk_sequence_model.1} parent=1 // pred_check_branch
      %18 = sbr.rel (0) target = $region9
    $region8: #{risk_sequence_model.1} parent=1 // pred_region
      %20 = vsyncadd [#allocation4], 0
      %s21 = sshll.u32 %s1, 4
      %s22 = int_to_ptr.hbm [resolvable:$true] %s21
      %s23 = sshll.u32 [#allocation3], 4
      %s24 = int_to_ptr.vmem [resolvable:$true] %s23
      %29 = dma.hbm_to_vmem [thread:$0]  %s22, 6144, %s24, [#allocation4], 2048, 2048, 128
    $region9: #{risk_sequence_model.1} parent=1 // pred_fallthru
      _
    // Predicated region
    $region10: #{risk_sequence_model.1} parent=1 // pred_check
      _
    $region11: #{risk_sequence_model.1} parent=1 // pred_check_branch
      %31 = sbr.rel (0) target = $region13
    $region12: #{risk_sequence_model.1} parent=1 // pred_region
      _
    $region13: #{risk_sequence_model.1} parent=1 // pred_fallthru
      _
    // Predicated region
    $region14: #{risk_sequence_model.1} parent=1 // pred_check
      _
    $region15: #{risk_sequence_model.1} parent=1 // pred_check_branch
      %33 = sbr.rel (0) target = $region17
    $region16: #{risk_sequence_model.1} parent=1 // pred_region
      _
    $region17: #{risk_sequence_model.1} parent=1 // pred_fallthru
      _
    // Predicated region
    $region18: #{risk_sequence_model.1} parent=1 // pred_check
      _
    $region19: #{risk_sequence_model.1} parent=1 // pred_check_branch
      %35 = sbr.rel (0) target = $region21
    $region20: #{risk_sequence_model.1} parent=1 // pred_region
      %37 = vsyncadd [#allocation6], 0
      %s38 = sshll.u32 %s4, 4
      %s39 = int_to_ptr.hbm [resolvable:$true] %s38
      %s40 = sshll.u32 [#allocation5], 4
      %s41 = int_to_ptr.vmem [resolvable:$true] %s40
      %46 = dma.hbm_to_vmem [thread:$0]  %s39, 4096, %s41, [#allocation6], 256, 256, 16
    $region21: #{risk_sequence_model.1} parent=1 // pred_fallthru
      _
    // Predicated region
    $region22: #{risk_sequence_model.1} parent=1 // pred_check
      _
    $region23: #{risk_sequence_model.1} parent=1 // pred_check_branch
      %48 = sbr.rel (0) target = $region25
    $region24: #{risk_sequence_model.1} parent=1 // pred_region
      _
    $region25: #{risk_sequence_model.1} parent=1 // pred_fallthru
      _
    // Predicated region
    $region26: #{risk_sequence_model.1} parent=1 // pred_check
      _
    $region27: #{risk_sequence_model.1} parent=1 // pred_check_branch
      %50 = sbr.rel (0) target = $region29
    $region28: #{risk_sequence_model.1} parent=1 // pred_region
      _
    $region29: #{risk_sequence_model.1} parent=1 // pred_fallthru
      _
    // Predicated region
    $region30: #{risk_sequence_model.1} parent=1 // pred_check
      _
    $region31: #{risk_sequence_model.1} parent=1 // pred_check_branch
      %52 = sbr.rel (0) target = $region33
    $region32: #{risk_sequence_model.1} parent=1 // pred_region
      _
    $region33: #{risk_sequence_model.1} parent=1 // pred_fallthru
      _
    // Predicated region
    $region34: #{risk_sequence_model.1} parent=1 // pred_check
      _
    $region35: #{risk_sequence_model.1} parent=1 // pred_check_branch
      %54 = sbr.rel (0) target = $region37
    $region36: #{risk_sequence_model.1} parent=1 // pred_region
      %56 = dma.done [#allocation4], 6144
    $region37: #{risk_sequence_model.1} parent=1 // pred_fallthru
      _
    // Predicated region
    $region38: #{risk_sequence_model.1} parent=1 // pred_check
      _
    $region39: #{risk_sequence_model.1} parent=1 // pred_check_branch
      %58 = sbr.rel (0) target = $region41
    $region40: #{risk_sequence_model.1} parent=1 // pred_region
      %60 = dma.done [#allocation6], 4096
    $region41: #{risk_sequence_model.1} parent=1 // pred_fallthru
      _
    %v61 = vld [vmem:[%s0] sm:$0xff]
    %v62 = vld [vmem:[#allocation3] sm:$0xff]
    %v63 = vld [vmem:[#allocation3 + $0x8] sm:$0xff]
    %v64 = vld [vmem:[#allocation3 + $0x10] sm:$0xff]
    %v65 = vld [vmem:[#allocation3 + $0x18] sm:$0xff]
    %v66 = vld [vmem:[#allocation3 + $0x20] sm:$0xff]
    %v67 = vld [vmem:[#allocation3 + $0x28] sm:$0xff]
    %v68 = vld [vmem:[#allocation3 + $0x30] sm:$0xff]
    %v69 = vld [vmem:[#allocation3 + $0x38] sm:$0xff]
    %v70 = vld [vmem:[#allocation3 + $0x40] sm:$0xff]
    %v71 = vld [vmem:[#allocation3 + $0x48] sm:$0xff]
    %v72 = vld [vmem:[#allocation3 + $0x50] sm:$0xff]
    %v73 = vld [vmem:[#allocation3 + $0x58] sm:$0xff]
    %v74 = vld [vmem:[#allocation3 + $0x60] sm:$0xff]
    %v75 = vld [vmem:[#allocation3 + $0x68] sm:$0xff]
    %v76 = vld [vmem:[#allocation3 + $0x70] sm:$0xff]
    %v77 = vld [vmem:[#allocation3 + $0x78] sm:$0xff]
    %v78 = vld [vmem:[#allocation3 + $0x80] sm:$0xff]
    %v79 = vld [vmem:[#allocation3 + $0x88] sm:$0xff]
    %v80 = vld [vmem:[#allocation3 + $0x90] sm:$0xff]
    %v81 = vld [vmem:[#allocation3 + $0x98] sm:$0xff]
    %v82 = vld [vmem:[#allocation3 + $0xa0] sm:$0xff]
    %v83 = vld [vmem:[#allocation3 + $0xa8] sm:$0xff]
    %v84 = vld [vmem:[#allocation3 + $0xb0] sm:$0xff]
    %v85 = vld [vmem:[#allocation3 + $0xb8] sm:$0xff]
    %v86 = vld [vmem:[#allocation3 + $0xc0] sm:$0xff]
    %v87 = vld [vmem:[#allocation3 + $0xc8] sm:$0xff]
    %v88 = vld [vmem:[#allocation3 + $0xd0] sm:$0xff]
    %v89 = vld [vmem:[#allocation3 + $0xd8] sm:$0xff]
    %v90 = vld [vmem:[#allocation3 + $0xe0] sm:$0xff]
    %v91 = vld [vmem:[#allocation3 + $0xe8] sm:$0xff]
    %v92 = vld [vmem:[#allocation3 + $0xf0] sm:$0xff]
    %v93 = vld [vmem:[#allocation3 + $0xf8] sm:$0xff]
    %v94 = vld [vmem:[#allocation3 + $0x100] sm:$0xff]
    %v95 = vld [vmem:[#allocation3 + $0x108] sm:$0xff]
    %v96 = vld [vmem:[#allocation3 + $0x110] sm:$0xff]
    %v97 = vld [vmem:[#allocation3 + $0x118] sm:$0xff]
    %v98 = vld [vmem:[#allocation3 + $0x120] sm:$0xff]
    %v99 = vld [vmem:[#allocation3 + $0x128] sm:$0xff]
    %v100 = vld [vmem:[#allocation3 + $0x130] sm:$0xff]
    %v101 = vld [vmem:[#allocation3 + $0x138] sm:$0xff]
    %v102 = vld [vmem:[#allocation3 + $0x140] sm:$0xff]
    %v103 = vld [vmem:[#allocation3 + $0x148] sm:$0xff]
    %v104 = vld [vmem:[#allocation3 + $0x150] sm:$0xff]
    %v105 = vld [vmem:[#allocation3 + $0x158] sm:$0xff]
    %v106 = vld [vmem:[#allocation3 + $0x160] sm:$0xff]
    %v107 = vld [vmem:[#allocation3 + $0x168] sm:$0xff]
    %v108 = vld [vmem:[#allocation3 + $0x170] sm:$0xff]
    %v109 = vld [vmem:[#allocation3 + $0x178] sm:$0xff]
    %v110 = vld [vmem:[%s2] sm:$0xff]
    %v111 = vld [vmem:[%s2 + $0x8] sm:$0xff]
    %v114 = vperm.slane %v110, 0
    %v115 = vperm.slane %v110, 1
    %v116 = vperm.slane %v110, 2
    %v117 = vperm.slane %v110, 3
    %v118 = vperm.slane %v110, 4
    %v119 = vperm.slane %v110, 5
    %v120 = vperm.slane %v110, 6
    %v121 = vperm.slane %v110, 7
    %v122 = vperm.slane %v111, 0
    %v123 = vperm.slane %v111, 1
    %v124 = vperm.slane %v111, 2
    %v125 = vperm.slane %v111, 3
    %v126 = vperm.slane %v111, 4
    %v127 = vperm.slane %v111, 5
    %v128 = vperm.slane %v111, 6
    %v129 = vperm.slane %v111, 7
    %vm146 = vcmask 195584
    %v148 = vsel %vm146, %v61, 0
    %150 = vmatpush.msra.mxu0 0.0
    %151 = vmatpush.msra.mxu0 0.0
    %152 = vmatpush.msra.mxu0 0.0
    %153 = vmatpush.msra.mxu0 0.0
    %154 = vmatpush.msra.mxu0 0.0
    %155 = vmatpush.msra.mxu0 0.0
    %156 = vmatpush.msra.mxu0 0.0
    %157 = vmatpush.msra.mxu0 0.0
    %158 = vmatpush.msra.mxu0 0.0
    %159 = vmatpush.msra.mxu0 0.0
    %160 = vmatpush.msra.mxu0 0.0
    %161 = vmatpush.msra.mxu0 0.0
    %162 = vmatpush.msra.mxu0 0.0
    %163 = vmatpush.msra.mxu0 %v94
    %164 = vmatpush.msra.mxu0 %v78
    %165 = vmatpush.msra.mxu0 %v62
    %166 = vmatmul.f32.gmra.mxu0 %v148
    %v167 = vpop.f32.mrf.mxu0
    %v168 = vadd.f32 %v114, %v167
    %169 = vdwg.mxu0
    %170 = vmatpush.msra.mxu0 0.0
    %171 = vmatpush.msra.mxu0 0.0
    %172 = vmatpush.msra.mxu0 0.0
    %173 = vmatpush.msra.mxu0 0.0
    %174 = vmatpush.msra.mxu0 0.0
    %175 = vmatpush.msra.mxu0 0.0
    %176 = vmatpush.msra.mxu0 0.0
    %177 = vmatpush.msra.mxu0 0.0
    %178 = vmatpush.msra.mxu0 0.0
    %179 = vmatpush.msra.mxu0 0.0
    %180 = vmatpush.msra.mxu0 0.0
    %181 = vmatpush.msra.mxu0 0.0
    %182 = vmatpush.msra.mxu0 0.0
    %183 = vmatpush.msra.mxu0 %v95
    %184 = vmatpush.msra.mxu0 %v79
    %185 = vmatpush.msra.mxu0 %v63
    %186 = vmatmul.f32.gmra.mxu0 %v148
    %v187 = vpop.f32.mrf.mxu0
    %v188 = vadd.f32 %v115, %v187
    %189 = vdwg.mxu0
    %190 = vmatpush.msra.mxu0 0.0
    %191 = vmatpush.msra.mxu0 0.0
    %192 = vmatpush.msra.mxu0 0.0
    %193 = vmatpush.msra.mxu0 0.0
    %194 = vmatpush.msra.mxu0 0.0
    %195 = vmatpush.msra.mxu0 0.0
    %196 = vmatpush.msra.mxu0 0.0
    %197 = vmatpush.msra.mxu0 0.0
    %198 = vmatpush.msra.mxu0 0.0
    %199 = vmatpush.msra.mxu0 0.0
    %200 = vmatpush.msra.mxu0 0.0
    %201 = vmatpush.msra.mxu0 0.0
    %202 = vmatpush.msra.mxu0 0.0
    %203 = vmatpush.msra.mxu0 %v96
    %204 = vmatpush.msra.mxu0 %v80
    %205 = vmatpush.msra.mxu0 %v64
    %206 = vmatmul.f32.gmra.mxu0 %v148
    %v207 = vpop.f32.mrf.mxu0
    %v208 = vadd.f32 %v116, %v207
    %209 = vdwg.mxu0
    %210 = vmatpush.msra.mxu0 0.0
    %211 = vmatpush.msra.mxu0 0.0
    %212 = vmatpush.msra.mxu0 0.0
    %213 = vmatpush.msra.mxu0 0.0
    %214 = vmatpush.msra.mxu0 0.0
    %215 = vmatpush.msra.mxu0 0.0
    %216 = vmatpush.msra.mxu0 0.0
    %217 = vmatpush.msra.mxu0 0.0
    %218 = vmatpush.msra.mxu0 0.0
    %219 = vmatpush.msra.mxu0 0.0
    %220 = vmatpush.msra.mxu0 0.0
    %221 = vmatpush.msra.mxu0 0.0
    %222 = vmatpush.msra.mxu0 0.0
    %223 = vmatpush.msra.mxu0 %v97
    %224 = vmatpush.msra.mxu0 %v81
    %225 = vmatpush.msra.mxu0 %v65
    %226 = vmatmul.f32.gmra.mxu0 %v148
    %v227 = vpop.f32.mrf.mxu0
    %v228 = vadd.f32 %v117, %v227
    %229 = vdwg.mxu0
    %230 = vmatpush.msra.mxu0 0.0
    %231 = vmatpush.msra.mxu0 0.0
    %232 = vmatpush.msra.mxu0 0.0
    %233 = vmatpush.msra.mxu0 0.0
    %234 = vmatpush.msra.mxu0 0.0
    %235 = vmatpush.msra.mxu0 0.0
    %236 = vmatpush.msra.mxu0 0.0
    %237 = vmatpush.msra.mxu0 0.0
    %238 = vmatpush.msra.mxu0 0.0
    %239 = vmatpush.msra.mxu0 0.0
    %240 = vmatpush.msra.mxu0 0.0
    %241 = vmatpush.msra.mxu0 0.0
    %242 = vmatpush.msra.mxu0 0.0
    %243 = vmatpush.msra.mxu0 %v98
    %244 = vmatpush.msra.mxu0 %v82
    %245 = vmatpush.msra.mxu0 %v66
    %246 = vmatmul.f32.gmra.mxu0 %v148
    %v247 = vpop.f32.mrf.mxu0
    %v248 = vadd.f32 %v118, %v247
    %249 = vdwg.mxu0
    %250 = vmatpush.msra.mxu0 0.0
    %251 = vmatpush.msra.mxu0 0.0
    %252 = vmatpush.msra.mxu0 0.0
    %253 = vmatpush.msra.mxu0 0.0
    %254 = vmatpush.msra.mxu0 0.0
    %255 = vmatpush.msra.mxu0 0.0
    %256 = vmatpush.msra.mxu0 0.0
    %257 = vmatpush.msra.mxu0 0.0
    %258 = vmatpush.msra.mxu0 0.0
    %259 = vmatpush.msra.mxu0 0.0
    %260 = vmatpush.msra.mxu0 0.0
    %261 = vmatpush.msra.mxu0 0.0
    %262 = vmatpush.msra.mxu0 0.0
    %263 = vmatpush.msra.mxu0 %v99
    %264 = vmatpush.msra.mxu0 %v83
    %265 = vmatpush.msra.mxu0 %v67
    %266 = vmatmul.f32.gmra.mxu0 %v148
    %v267 = vpop.f32.mrf.mxu0
    %v268 = vadd.f32 %v119, %v267
    %269 = vdwg.mxu0
    %270 = vmatpush.msra.mxu0 0.0
    %271 = vmatpush.msra.mxu0 0.0
    %272 = vmatpush.msra.mxu0 0.0
    %273 = vmatpush.msra.mxu0 0.0
    %274 = vmatpush.msra.mxu0 0.0
    %275 = vmatpush.msra.mxu0 0.0
    %276 = vmatpush.msra.mxu0 0.0
    %277 = vmatpush.msra.mxu0 0.0
    %278 = vmatpush.msra.mxu0 0.0
    %279 = vmatpush.msra.mxu0 0.0
    %280 = vmatpush.msra.mxu0 0.0
    %281 = vmatpush.msra.mxu0 0.0
    %282 = vmatpush.msra.mxu0 0.0
    %283 = vmatpush.msra.mxu0 %v100
    %284 = vmatpush.msra.mxu0 %v84
    %285 = vmatpush.msra.mxu0 %v68
    %286 = vmatmul.f32.gmra.mxu0 %v148
    %v287 = vpop.f32.mrf.mxu0
    %v288 = vadd.f32 %v120, %v287
    %289 = vdwg.mxu0
    %290 = vmatpush.msra.mxu0 0.0
    %291 = vmatpush.msra.mxu0 0.0
    %292 = vmatpush.msra.mxu0 0.0
    %293 = vmatpush.msra.mxu0 0.0
    %294 = vmatpush.msra.mxu0 0.0
    %295 = vmatpush.msra.mxu0 0.0
    %296 = vmatpush.msra.mxu0 0.0
    %297 = vmatpush.msra.mxu0 0.0
    %298 = vmatpush.msra.mxu0 0.0
    %299 = vmatpush.msra.mxu0 0.0
    %300 = vmatpush.msra.mxu0 0.0
    %301 = vmatpush.msra.mxu0 0.0
    %302 = vmatpush.msra.mxu0 0.0
    %303 = vmatpush.msra.mxu0 %v101
    %304 = vmatpush.msra.mxu0 %v85
    %305 = vmatpush.msra.mxu0 %v69
    %306 = vmatmul.f32.gmra.mxu0 %v148
    %v307 = vpop.f32.mrf.mxu0
    %v308 = vadd.f32 %v121, %v307
    %309 = vdwg.mxu0
    %310 = vmatpush.msra.mxu0 0.0
    %311 = vmatpush.msra.mxu0 0.0
    %312 = vmatpush.msra.mxu0 0.0
    %313 = vmatpush.msra.mxu0 0.0
    %314 = vmatpush.msra.mxu0 0.0
    %315 = vmatpush.msra.mxu0 0.0
    %316 = vmatpush.msra.mxu0 0.0
    %317 = vmatpush.msra.mxu0 0.0
    %318 = vmatpush.msra.mxu0 0.0
    %319 = vmatpush.msra.mxu0 0.0
    %320 = vmatpush.msra.mxu0 0.0
    %321 = vmatpush.msra.mxu0 0.0
    %322 = vmatpush.msra.mxu0 0.0
    %323 = vmatpush.msra.mxu0 %v102
    %324 = vmatpush.msra.mxu0 %v86
    %325 = vmatpush.msra.mxu0 %v70
    %326 = vmatmul.f32.gmra.mxu0 %v148
    %v327 = vpop.f32.mrf.mxu0
    %v328 = vadd.f32 %v122, %v327
    %329 = vdwg.mxu0
    %330 = vmatpush.msra.mxu0 0.0
    %331 = vmatpush.msra.mxu0 0.0
    %332 = vmatpush.msra.mxu0 0.0
    %333 = vmatpush.msra.mxu0 0.0
    %334 = vmatpush.msra.mxu0 0.0
    %335 = vmatpush.msra.mxu0 0.0
    %336 = vmatpush.msra.mxu0 0.0
    %337 = vmatpush.msra.mxu0 0.0
    %338 = vmatpush.msra.mxu0 0.0
    %339 = vmatpush.msra.mxu0 0.0
    %340 = vmatpush.msra.mxu0 0.0
    %341 = vmatpush.msra.mxu0 0.0
    %342 = vmatpush.msra.mxu0 0.0
    %343 = vmatpush.msra.mxu0 %v103
    %344 = vmatpush.msra.mxu0 %v87
    %345 = vmatpush.msra.mxu0 %v71
    %346 = vmatmul.f32.gmra.mxu0 %v148
    %v347 = vpop.f32.mrf.mxu0
    %v348 = vadd.f32 %v123, %v347
    %349 = vdwg.mxu0
    %350 = vmatpush.msra.mxu0 0.0
    %351 = vmatpush.msra.mxu0 0.0
    %352 = vmatpush.msra.mxu0 0.0
    %353 = vmatpush.msra.mxu0 0.0
    %354 = vmatpush.msra.mxu0 0.0
    %355 = vmatpush.msra.mxu0 0.0
    %356 = vmatpush.msra.mxu0 0.0
    %357 = vmatpush.msra.mxu0 0.0
    %358 = vmatpush.msra.mxu0 0.0
    %359 = vmatpush.msra.mxu0 0.0
    %360 = vmatpush.msra.mxu0 0.0
    %361 = vmatpush.msra.mxu0 0.0
    %362 = vmatpush.msra.mxu0 0.0
    %363 = vmatpush.msra.mxu0 %v104
    %364 = vmatpush.msra.mxu0 %v88
    %365 = vmatpush.msra.mxu0 %v72
    %366 = vmatmul.f32.gmra.mxu0 %v148
    %v367 = vpop.f32.mrf.mxu0
    %v368 = vadd.f32 %v124, %v367
    %369 = vdwg.mxu0
    %370 = vmatpush.msra.mxu0 0.0
    %371 = vmatpush.msra.mxu0 0.0
    %372 = vmatpush.msra.mxu0 0.0
    %373 = vmatpush.msra.mxu0 0.0
    %374 = vmatpush.msra.mxu0 0.0
    %375 = vmatpush.msra.mxu0 0.0
    %376 = vmatpush.msra.mxu0 0.0
    %377 = vmatpush.msra.mxu0 0.0
    %378 = vmatpush.msra.mxu0 0.0
    %379 = vmatpush.msra.mxu0 0.0
    %380 = vmatpush.msra.mxu0 0.0
    %381 = vmatpush.msra.mxu0 0.0
    %382 = vmatpush.msra.mxu0 0.0
    %383 = vmatpush.msra.mxu0 %v105
    %384 = vmatpush.msra.mxu0 %v89
    %385 = vmatpush.msra.mxu0 %v73
    %386 = vmatmul.f32.gmra.mxu0 %v148
    %v387 = vpop.f32.mrf.mxu0
    %v388 = vadd.f32 %v125, %v387
    %389 = vdwg.mxu0
    %390 = vmatpush.msra.mxu0 0.0
    %391 = vmatpush.msra.mxu0 0.0
    %392 = vmatpush.msra.mxu0 0.0
    %393 = vmatpush.msra.mxu0 0.0
    %394 = vmatpush.msra.mxu0 0.0
    %395 = vmatpush.msra.mxu0 0.0
    %396 = vmatpush.msra.mxu0 0.0
    %397 = vmatpush.msra.mxu0 0.0
    %398 = vmatpush.msra.mxu0 0.0
    %399 = vmatpush.msra.mxu0 0.0
    %400 = vmatpush.msra.mxu0 0.0
    %401 = vmatpush.msra.mxu0 0.0
    %402 = vmatpush.msra.mxu0 0.0
    %403 = vmatpush.msra.mxu0 %v106
    %404 = vmatpush.msra.mxu0 %v90
    %405 = vmatpush.msra.mxu0 %v74
    %406 = vmatmul.f32.gmra.mxu0 %v148
    %v407 = vpop.f32.mrf.mxu0
    %v408 = vadd.f32 %v126, %v407
    %409 = vdwg.mxu0
    %410 = vmatpush.msra.mxu0 0.0
    %411 = vmatpush.msra.mxu0 0.0
    %412 = vmatpush.msra.mxu0 0.0
    %413 = vmatpush.msra.mxu0 0.0
    %414 = vmatpush.msra.mxu0 0.0
    %415 = vmatpush.msra.mxu0 0.0
    %416 = vmatpush.msra.mxu0 0.0
    %417 = vmatpush.msra.mxu0 0.0
    %418 = vmatpush.msra.mxu0 0.0
    %419 = vmatpush.msra.mxu0 0.0
    %420 = vmatpush.msra.mxu0 0.0
    %421 = vmatpush.msra.mxu0 0.0
    %422 = vmatpush.msra.mxu0 0.0
    %423 = vmatpush.msra.mxu0 %v107
    %424 = vmatpush.msra.mxu0 %v91
    %425 = vmatpush.msra.mxu0 %v75
    %426 = vmatmul.f32.gmra.mxu0 %v148
    %v427 = vpop.f32.mrf.mxu0
    %v428 = vadd.f32 %v127, %v427
    %429 = vdwg.mxu0
    %430 = vmatpush.msra.mxu0 0.0
    %431 = vmatpush.msra.mxu0 0.0
    %432 = vmatpush.msra.mxu0 0.0
    %433 = vmatpush.msra.mxu0 0.0
    %434 = vmatpush.msra.mxu0 0.0
    %435 = vmatpush.msra.mxu0 0.0
    %436 = vmatpush.msra.mxu0 0.0
    %437 = vmatpush.msra.mxu0 0.0
    %438 = vmatpush.msra.mxu0 0.0
    %439 = vmatpush.msra.mxu0 0.0
    %440 = vmatpush.msra.mxu0 0.0
    %441 = vmatpush.msra.mxu0 0.0
    %442 = vmatpush.msra.mxu0 0.0
    %443 = vmatpush.msra.mxu0 %v108
    %444 = vmatpush.msra.mxu0 %v92
    %445 = vmatpush.msra.mxu0 %v76
    %446 = vmatmul.f32.gmra.mxu0 %v148
    %v447 = vpop.f32.mrf.mxu0
    %v448 = vadd.f32 %v128, %v447
    %449 = vdwg.mxu0
    %450 = vmatpush.msra.mxu0 0.0
    %451 = vmatpush.msra.mxu0 0.0
    %452 = vmatpush.msra.mxu0 0.0
    %453 = vmatpush.msra.mxu0 0.0
    %454 = vmatpush.msra.mxu0 0.0
    %455 = vmatpush.msra.mxu0 0.0
    %456 = vmatpush.msra.mxu0 0.0
    %457 = vmatpush.msra.mxu0 0.0
    %458 = vmatpush.msra.mxu0 0.0
    %459 = vmatpush.msra.mxu0 0.0
    %460 = vmatpush.msra.mxu0 0.0
    %461 = vmatpush.msra.mxu0 0.0
    %462 = vmatpush.msra.mxu0 0.0
    %463 = vmatpush.msra.mxu0 %v109
    %464 = vmatpush.msra.mxu0 %v93
    %465 = vmatpush.msra.mxu0 %v77
    %466 = vmatmul.f32.gmra.mxu0 %v148
    %v467 = vpop.f32.mrf.mxu0
    %v468 = vadd.f32 %v129, %v467
    %469 = vdwg.mxu0
    %470 = vst [vmem:[#allocation2] sm:$0xff] %v168
    %471 = vst [vmem:[#allocation2 + $0x8] sm:$0xff] %v188
    %472 = vst [vmem:[#allocation2 + $0x10] sm:$0xff] %v208
    %473 = vst [vmem:[#allocation2 + $0x18] sm:$0xff] %v228
    %474 = vst [vmem:[#allocation2 + $0x20] sm:$0xff] %v248
    %475 = vst [vmem:[#allocation2 + $0x28] sm:$0xff] %v268
    %476 = vst [vmem:[#allocation2 + $0x30] sm:$0xff] %v288
    %477 = vst [vmem:[#allocation2 + $0x38] sm:$0xff] %v308
    %478 = vst [vmem:[#allocation2 + $0x40] sm:$0xff] %v328
    %479 = vst [vmem:[#allocation2 + $0x48] sm:$0xff] %v348
    %480 = vst [vmem:[#allocation2 + $0x50] sm:$0xff] %v368
    %481 = vst [vmem:[#allocation2 + $0x58] sm:$0xff] %v388
    %482 = vst [vmem:[#allocation2 + $0x60] sm:$0xff] %v408
    %483 = vst [vmem:[#allocation2 + $0x68] sm:$0xff] %v428
    %484 = vst [vmem:[#allocation2 + $0x70] sm:$0xff] %v448
    %485 = vst [vmem:[#allocation2 + $0x78] sm:$0xff] %v468
    %v486 = vld [vmem:[#allocation2] sm:$0xff]
    %v487 = vld [vmem:[#allocation2 + $0x8] sm:$0xff]
    %v488 = vld [vmem:[%s3] sm:$0xff]
    %v489 = vld [vmem:[%s3 + $0x8] sm:$0xff]
    %v490 = vld [vmem:[%s3 + $0x10] sm:$0xff]
    %v491 = vld [vmem:[%s3 + $0x18] sm:$0xff]
    %v492 = vld [vmem:[%s3 + $0x20] sm:$0xff]
    %v493 = vld [vmem:[%s3 + $0x28] sm:$0xff]
    %v494 = vld [vmem:[%s3 + $0x30] sm:$0xff]
    %v495 = vld [vmem:[%s3 + $0x38] sm:$0xff]
    %v496 = vld [vmem:[%s3 + $0x40] sm:$0xff]
    %v497 = vld [vmem:[%s3 + $0x48] sm:$0xff]
    %v498 = vld [vmem:[%s3 + $0x50] sm:$0xff]
    %v499 = vld [vmem:[%s3 + $0x58] sm:$0xff]
    %v500 = vld [vmem:[%s3 + $0x60] sm:$0xff]
    %v501 = vld [vmem:[%s3 + $0x68] sm:$0xff]
    %v502 = vld [vmem:[%s3 + $0x70] sm:$0xff]
    %v503 = vld [vmem:[%s3 + $0x78] sm:$0xff]
    %vm504 = vcmask 523264
    %v506 = vsel %vm504, 0.0, 0
    %508 = vmatpush.msra.mxu0 0.0
    %509 = vmatpush.msra.mxu0 0.0
    %510 = vmatpush.msra.mxu0 0.0
    %511 = vmatpush.msra.mxu0 0.0
    %512 = vmatpush.msra.mxu0 0.0
    %513 = vmatpush.msra.mxu0 0.0
    %514 = vmatpush.msra.mxu0 0.0
    %515 = vmatpush.msra.mxu0 0.0
    %516 = vmatpush.msra.mxu0 %v502
    %517 = vmatpush.msra.mxu0 %v500
    %518 = vmatpush.msra.mxu0 %v498
    %519 = vmatpush.msra.mxu0 %v496
    %520 = vmatpush.msra.mxu0 %v494
    %521 = vmatpush.msra.mxu0 %v492
    %522 = vmatpush.msra.mxu0 %v490
    %523 = vmatpush.msra.mxu0 %v488
    %524 = vmatmul.f32.gmra.mxu0 %v506
    %v525 = vpop.f32.mrf.mxu0
    %v526 = vadd.f32 0.0, %v525
    %527 = vdwg.mxu0
    %528 = vmatpush.msra.mxu0 0.0
    %529 = vmatpush.msra.mxu0 0.0
    %530 = vmatpush.msra.mxu0 0.0
    %531 = vmatpush.msra.mxu0 0.0
    %532 = vmatpush.msra.mxu0 0.0
    %533 = vmatpush.msra.mxu0 0.0
    %534 = vmatpush.msra.mxu0 0.0
    %535 = vmatpush.msra.mxu0 0.0
    %536 = vmatpush.msra.mxu0 %v503
    %537 = vmatpush.msra.mxu0 %v501
    %538 = vmatpush.msra.mxu0 %v499
    %539 = vmatpush.msra.mxu0 %v497
    %540 = vmatpush.msra.mxu0 %v495
    %541 = vmatpush.msra.mxu0 %v493
    %542 = vmatpush.msra.mxu0 %v491
    %543 = vmatpush.msra.mxu0 %v489
    %544 = vmatmul.f32.gmra.mxu0 %v506
    %v545 = vpop.f32.mrf.mxu0
    %v546 = vadd.f32 0.0, %v545
    %547 = vdwg.mxu0
    %v548 = vadd.f32 %v486, %v526
    %v549 = vadd.f32 %v487, %v546
    %v550 = vxor.u32 %v548, 2147483648
    %v551 = vxor.u32 %v549, 2147483648
    %v552 = vmul.f32 %v550, 1.442695
    %v553 = vpow.pop %v552
    %v554 = vmul.f32 %v551, 1.442695
    %v555 = vpow.pop %v554
    %v556 = vadd.f32 %v553, 1.0
    %v557 = vadd.f32 %v555, 1.0
    %v558 = vrcp.pop %v556
    %v559 = vmul.f32 %v556, %v558
    %v560 = vsub.f32 1.0, %v559
    %v561 = vmul.f32 %v558, %v560
    %v562 = vadd.f32 %v558, %v561
    %vm563 = vweird.f32 %v556
    %vm564 = vweird.f32 %v558
    %vm565 = vmor %vm563, %vm564
    %v566 = vsel %vm565, %v558, %v562
    %v567 = vand.u32 2147483647, %v556
    %vm568 = vcmp.eq.f32.partialorder %v567, 8.507059e+37
    %v569 = vand.u32 %v556, 2147483648
    %v570 = vor.u32 1.1754944e-38, %v569
    %v571 = vsel %vm568, %v570, %v566
    %v572 = vmul.f32 1.0, %v571
    %v573 = vrcp.pop %v557
    %v574 = vmul.f32 %v557, %v573
    %v575 = vsub.f32 1.0, %v574
    %v576 = vmul.f32 %v573, %v575
    %v577 = vadd.f32 %v573, %v576
    %vm578 = vweird.f32 %v557
    %vm579 = vweird.f32 %v573
    %vm580 = vmor %vm578, %vm579
    %v581 = vsel %vm580, %v573, %v577
    %v582 = vand.u32 2147483647, %v557
    %vm583 = vcmp.eq.f32.partialorder %v582, 8.507059e+37
    %v584 = vand.u32 %v557, 2147483648
    %v585 = vor.u32 1.1754944e-38, %v584
    %v586 = vsel %vm583, %v585, %v581
    %v587 = vmul.f32 1.0, %v586
    %v588 = vtanh.pop %v549
    %v589 = vmul.f32 %v572, 0.0
    %591 = vrot.lane.b32.xlu0 %v588, 64
    %v592 = vpop.permute.xlu0 %591
    %v594 = vmul.f32 %v572, %v592
    %596 = vrot.lane.b32.xlu0 %v594, 64
    %v597 = vpop.permute.xlu0 %596
    %v599 = vadd.f32 %v589, %v597
    %v600 = vtanh.pop %v599
    %602 = vrot.lane.b32.xlu0 %v600, 64
    %v603 = vpop.permute.xlu0 %602
    %v605 = vmul.f32 %v587, %v603
    %v606 = vsel %vm504, %v605, 0.0
    %v607 = vld [vmem:[#allocation5] sm:$0xff]
    %v608 = vld [vmem:[#allocation5 + $0x8] sm:$0xff]
    %v609 = vld [vmem:[#allocation5 + $0x10] sm:$0xff]
    %v610 = vld [vmem:[#allocation5 + $0x18] sm:$0xff]
    %v611 = vld [vmem:[#allocation5 + $0x20] sm:$0xff]
    %v612 = vld [vmem:[#allocation5 + $0x28] sm:$0xff]
    %v613 = vld [vmem:[#allocation5 + $0x30] sm:$0xff]
    %v614 = vld [vmem:[#allocation5 + $0x38] sm:$0xff]
    %v615 = vld [vmem:[#allocation5 + $0x40] sm:$0xff]
    %v616 = vld [vmem:[#allocation5 + $0x48] sm:$0xff]
    %v617 = vld [vmem:[#allocation5 + $0x50] sm:$0xff]
    %v618 = vld [vmem:[#allocation5 + $0x58] sm:$0xff]
    %v619 = vld [vmem:[#allocation5 + $0x60] sm:$0xff]
    %v620 = vld [vmem:[#allocation5 + $0x68] sm:$0xff]
    %v621 = vld [vmem:[#allocation5 + $0x70] sm:$0xff]
    %v622 = vld [vmem:[#allocation5 + $0x78] sm:$0xff]
    %v623 = vld [vmem:[#allocation5 + $0x80] sm:$0xff]
    %v624 = vld [vmem:[#allocation5 + $0x88] sm:$0xff]
    %v625 = vld [vmem:[#allocation5 + $0x90] sm:$0xff]
    %v626 = vld [vmem:[#allocation5 + $0x98] sm:$0xff]
    %v627 = vld [vmem:[#allocation5 + $0xa0] sm:$0xff]
    %v628 = vld [vmem:[#allocation5 + $0xa8] sm:$0xff]
    %v629 = vld [vmem:[#allocation5 + $0xb0] sm:$0xff]
    %v630 = vld [vmem:[#allocation5 + $0xb8] sm:$0xff]
    %v631 = vld [vmem:[#allocation5 + $0xc0] sm:$0xff]
    %v632 = vld [vmem:[#allocation5 + $0xc8] sm:$0xff]
    %v633 = vld [vmem:[#allocation5 + $0xd0] sm:$0xff]
    %v634 = vld [vmem:[#allocation5 + $0xd8] sm:$0xff]
    %v635 = vld [vmem:[#allocation5 + $0xe0] sm:$0xff]
    %v636 = vld [vmem:[#allocation5 + $0xe8] sm:$0xff]
    %v637 = vld [vmem:[#allocation5 + $0xf0] sm:$0xff]
    %v638 = vld [vmem:[#allocation5 + $0xf8] sm:$0xff]
    %v639 = vld [vmem:[%s5] sm:$0x3]
    %v641 = vperm.slane %v639, 0
    %v642 = vperm.slane %v639, 1
    %645 = vmatpush.msra.mxu0 %v637
    %646 = vmatpush.msra.mxu0 %v635
    %647 = vmatpush.msra.mxu0 %v633
    %648 = vmatpush.msra.mxu0 %v631
    %649 = vmatpush.msra.mxu0 %v629
    %650 = vmatpush.msra.mxu0 %v627
    %651 = vmatpush.msra.mxu0 %v625
    %652 = vmatpush.msra.mxu0 %v623
    %653 = vmatpush.msra.mxu0 %v621
    %654 = vmatpush.msra.mxu0 %v619
    %655 = vmatpush.msra.mxu0 %v617
    %656 = vmatpush.msra.mxu0 %v615
    %657 = vmatpush.msra.mxu0 %v613
    %658 = vmatpush.msra.mxu0 %v611
    %659 = vmatpush.msra.mxu0 %v609
    %660 = vmatpush.msra.mxu0 %v607
    %661 = vmatmul.f32.gmra.mxu0 %v606
    %v662 = vpop.f32.mrf.mxu0
    %v663 = vadd.f32 %v641, %v662
    %664 = vdwg.mxu0
    %665 = vmatpush.msra.mxu0 %v638
    %666 = vmatpush.msra.mxu0 %v636
    %667 = vmatpush.msra.mxu0 %v634
    %668 = vmatpush.msra.mxu0 %v632
    %669 = vmatpush.msra.mxu0 %v630
    %670 = vmatpush.msra.mxu0 %v628
    %671 = vmatpush.msra.mxu0 %v626
    %672 = vmatpush.msra.mxu0 %v624
    %673 = vmatpush.msra.mxu0 %v622
    %674 = vmatpush.msra.mxu0 %v620
    %675 = vmatpush.msra.mxu0 %v618
    %676 = vmatpush.msra.mxu0 %v616
    %677 = vmatpush.msra.mxu0 %v614
    %678 = vmatpush.msra.mxu0 %v612
    %679 = vmatpush.msra.mxu0 %v610
    %680 = vmatpush.msra.mxu0 %v608
    %681 = vmatmul.f32.gmra.mxu0 %v606
    %v682 = vpop.f32.mrf.mxu0
    %v683 = vadd.f32 %v642, %v682
    %684 = vdwg.mxu0
    %v685 = vxor.u32 %v663, 2147483648
    %v686 = vxor.u32 %v683, 2147483648
    %v687 = vmul.f32 %v685, 1.442695
    %v688 = vpow.pop %v687
    %v689 = vmul.f32 %v686, 1.442695
    %v690 = vpow.pop %v689
    %v691 = vadd.f32 %v688, 1.0
    %v692 = vadd.f32 %v690, 1.0
    %v693 = vrcp.pop %v691
    %v694 = vmul.f32 %v691, %v693
    %v695 = vsub.f32 1.0, %v694
    %v696 = vmul.f32 %v693, %v695
    %v697 = vadd.f32 %v693, %v696
    %vm698 = vweird.f32 %v691
    %vm699 = vweird.f32 %v693
    %vm700 = vmor %vm698, %vm699
    %v701 = vsel %vm700, %v693, %v697
    %v702 = vand.u32 2147483647, %v691
    %vm703 = vcmp.eq.f32.partialorder %v702, 8.507059e+37
    %v704 = vand.u32 %v691, 2147483648
    %v705 = vor.u32 1.1754944e-38, %v704
    %v706 = vsel %vm703, %v705, %v701
    %v707 = vmul.f32 1.0, %v706
    %v708 = vrcp.pop %v692
    %v709 = vmul.f32 %v692, %v708
    %v710 = vsub.f32 1.0, %v709
    %v711 = vmul.f32 %v708, %v710
    %v712 = vadd.f32 %v708, %v711
    %vm713 = vweird.f32 %v692
    %vm714 = vweird.f32 %v708
    %vm715 = vmor %vm713, %vm714
    %v716 = vsel %vm715, %v708, %v712
    %v717 = vand.u32 2147483647, %v692
    %vm718 = vcmp.eq.f32.partialorder %v717, 8.507059e+37
    %v719 = vand.u32 %v692, 2147483648
    %v720 = vor.u32 1.1754944e-38, %v719
    %v721 = vsel %vm718, %v720, %v716
    %v722 = vmul.f32 1.0, %v721
    %v723 = vtanh.pop %v683
    %v724 = vmul.f32 %v707, 0.0
    %726 = vrot.lane.b32.xlu0 %v723, 64
    %v727 = vpop.permute.xlu0 %726
    %v729 = vmul.f32 %v707, %v727
    %731 = vrot.lane.b32.xlu0 %v729, 64
    %v732 = vpop.permute.xlu0 %731
    %v734 = vadd.f32 %v724, %v732
    %v735 = vtanh.pop %v734
    %737 = vrot.lane.b32.xlu0 %v735, 64
    %v738 = vpop.permute.xlu0 %737
    %v740 = vmul.f32 %v722, %v738
    %v741 = vld [vmem:[#allocation2 + $0x10] sm:$0xff]
    %v742 = vld [vmem:[#allocation2 + $0x18] sm:$0xff]
    %v744 = vsel %vm504, %v605, 0
    %746 = vmatpush.msra.mxu0 0.0
    %747 = vmatpush.msra.mxu0 0.0
    %748 = vmatpush.msra.mxu0 0.0
    %749 = vmatpush.msra.mxu0 0.0
    %750 = vmatpush.msra.mxu0 0.0
    %751 = vmatpush.msra.mxu0 0.0
    %752 = vmatpush.msra.mxu0 0.0
    %753 = vmatpush.msra.mxu0 0.0
    %754 = vmatpush.msra.mxu0 %v502
    %755 = vmatpush.msra.mxu0 %v500
    %756 = vmatpush.msra.mxu0 %v498
    %757 = vmatpush.msra.mxu0 %v496
    %758 = vmatpush.msra.mxu0 %v494
    %759 = vmatpush.msra.mxu0 %v492
    %760 = vmatpush.msra.mxu0 %v490
    %761 = vmatpush.msra.mxu0 %v488
    %762 = vmatmul.f32.gmra.mxu0 %v744
    %v763 = vpop.f32.mrf.mxu0
    %v764 = vadd.f32 0.0, %v763
    %765 = vdwg.mxu0
    %766 = vmatpush.msra.mxu0 0.0
    %767 = vmatpush.msra.mxu0 0.0
    %768 = vmatpush.msra.mxu0 0.0
    %769 = vmatpush.msra.mxu0 0.0
    %770 = vmatpush.msra.mxu0 0.0
    %771 = vmatpush.msra.mxu0 0.0
    %772 = vmatpush.msra.mxu0 0.0
    %773 = vmatpush.msra.mxu0 0.0
    %774 = vmatpush.msra.mxu0 %v503
    %775 = vmatpush.msra.mxu0 %v501
    %776 = vmatpush.msra.mxu0 %v499
    %777 = vmatpush.msra.mxu0 %v497
    %778 = vmatpush.msra.mxu0 %v495
    %779 = vmatpush.msra.mxu0 %v493
    %780 = vmatpush.msra.mxu0 %v491
    %781 = vmatpush.msra.mxu0 %v489
    %782 = vmatmul.f32.gmra.mxu0 %v744
    %v783 = vpop.f32.mrf.mxu0
    %v784 = vadd.f32 0.0, %v783
    %785 = vdwg.mxu0
    %v786 = vadd.f32 %v741, %v764
    %v787 = vadd.f32 %v742, %v784
    %v788 = vxor.u32 %v786, 2147483648
    %v789 = vxor.u32 %v787, 2147483648
    %v790 = vmul.f32 %v788, 1.442695
    %v791 = vpow.pop %v790
    %v792 = vmul.f32 %v789, 1.442695
    %v793 = vpow.pop %v792
    %v794 = vadd.f32 %v791, 1.0
    %v795 = vadd.f32 %v793, 1.0
    %v796 = vrcp.pop %v794
    %v797 = vmul.f32 %v794, %v796
    %v798 = vsub.f32 1.0, %v797
    %v799 = vmul.f32 %v796, %v798
    %v800 = vadd.f32 %v796, %v799
    %vm801 = vweird.f32 %v794
    %vm802 = vweird.f32 %v796
    %vm803 = vmor %vm801, %vm802
    %v804 = vsel %vm803, %v796, %v800
    %v805 = vand.u32 2147483647, %v794
    %vm806 = vcmp.eq.f32.partialorder %v805, 8.507059e+37
    %v807 = vand.u32 %v794, 2147483648
    %v808 = vor.u32 1.1754944e-38, %v807
    %v809 = vsel %vm806, %v808, %v804
    %v810 = vmul.f32 1.0, %v809
    %v811 = vrcp.pop %v795
    %v812 = vmul.f32 %v795, %v811
    %v813 = vsub.f32 1.0, %v812
    %v814 = vmul.f32 %v811, %v813
    %v815 = vadd.f32 %v811, %v814
    %vm816 = vweird.f32 %v795
    %vm817 = vweird.f32 %v811
    %vm818 = vmor %vm816, %vm817
    %v819 = vsel %vm818, %v811, %v815
    %v820 = vand.u32 2147483647, %v795
    %vm821 = vcmp.eq.f32.partialorder %v820, 8.507059e+37
    %v822 = vand.u32 %v795, 2147483648
    %v823 = vor.u32 1.1754944e-38, %v822
    %v824 = vsel %vm821, %v823, %v819
    %v825 = vmul.f32 1.0, %v824
    %v826 = vtanh.pop %v787
    %v827 = vmul.f32 %v810, %v599
    %829 = vrot.lane.b32.xlu0 %v826, 64
    %v830 = vpop.permute.xlu0 %829
    %v832 = vmul.f32 %v810, %v830
    %834 = vrot.lane.b32.xlu0 %v832, 64
    %v835 = vpop.permute.xlu0 %834
    %v837 = vadd.f32 %v827, %v835
    %v838 = vtanh.pop %v837
    %840 = vrot.lane.b32.xlu0 %v838, 64
    %v841 = vpop.permute.xlu0 %840
    %v843 = vmul.f32 %v825, %v841
    %845 = vrot.lane.b32.xlu0 %v740, 64
    %v846 = vpop.permute.xlu0 %845
    %v848 = vsel %vm504, %v843, %v846
    %849 = vmatpush.msra.mxu0 %v637
    %850 = vmatpush.msra.mxu0 %v635
    %851 = vmatpush.msra.mxu0 %v633
    %852 = vmatpush.msra.mxu0 %v631
    %853 = vmatpush.msra.mxu0 %v629
    %854 = vmatpush.msra.mxu0 %v627
    %855 = vmatpush.msra.mxu0 %v625
    %856 = vmatpush.msra.mxu0 %v623
    %857 = vmatpush.msra.mxu0 %v621
    %858 = vmatpush.msra.mxu0 %v619
    %859 = vmatpush.msra.mxu0 %v617
    %860 = vmatpush.msra.mxu0 %v615
    %861 = vmatpush.msra.mxu0 %v613
    %862 = vmatpush.msra.mxu0 %v611
    %863 = vmatpush.msra.mxu0 %v609
    %864 = vmatpush.msra.mxu0 %v607
    %865 = vmatmul.f32.gmra.mxu0 %v848
    %v866 = vpop.f32.mrf.mxu0
    %v867 = vadd.f32 %v641, %v866
    %868 = vdwg.mxu0
    %869 = vmatpush.msra.mxu0 %v638
    %870 = vmatpush.msra.mxu0 %v636
    %871 = vmatpush.msra.mxu0 %v634
    %872 = vmatpush.msra.mxu0 %v632
    %873 = vmatpush.msra.mxu0 %v630
    %874 = vmatpush.msra.mxu0 %v628
    %875 = vmatpush.msra.mxu0 %v626
    %876 = vmatpush.msra.mxu0 %v624
    %877 = vmatpush.msra.mxu0 %v622
    %878 = vmatpush.msra.mxu0 %v620
    %879 = vmatpush.msra.mxu0 %v618
    %880 = vmatpush.msra.mxu0 %v616
    %881 = vmatpush.msra.mxu0 %v614
    %882 = vmatpush.msra.mxu0 %v612
    %883 = vmatpush.msra.mxu0 %v610
    %884 = vmatpush.msra.mxu0 %v608
    %885 = vmatmul.f32.gmra.mxu0 %v848
    %v886 = vpop.f32.mrf.mxu0
    %v887 = vadd.f32 %v642, %v886
    %888 = vdwg.mxu0
    %v889 = vxor.u32 %v867, 2147483648
    %v890 = vxor.u32 %v887, 2147483648
    %v891 = vmul.f32 %v889, 1.442695
    %v892 = vpow.pop %v891
    %v893 = vmul.f32 %v890, 1.442695
    %v894 = vpow.pop %v893
    %v895 = vadd.f32 %v892, 1.0
    %v896 = vadd.f32 %v894, 1.0
    %v897 = vrcp.pop %v895
    %v898 = vmul.f32 %v895, %v897
    %v899 = vsub.f32 1.0, %v898
    %v900 = vmul.f32 %v897, %v899
    %v901 = vadd.f32 %v897, %v900
    %vm902 = vweird.f32 %v895
    %vm903 = vweird.f32 %v897
    %vm904 = vmor %vm902, %vm903
    %v905 = vsel %vm904, %v897, %v901
    %v906 = vand.u32 2147483647, %v895
    %vm907 = vcmp.eq.f32.partialorder %v906, 8.507059e+37
    %v908 = vand.u32 %v895, 2147483648
    %v909 = vor.u32 1.1754944e-38, %v908
    %v910 = vsel %vm907, %v909, %v905
    %v911 = vmul.f32 1.0, %v910
    %v912 = vrcp.pop %v896
    %v913 = vmul.f32 %v896, %v912
    %v914 = vsub.f32 1.0, %v913
    %v915 = vmul.f32 %v912, %v914
    %v916 = vadd.f32 %v912, %v915
    %vm917 = vweird.f32 %v896
    %vm918 = vweird.f32 %v912
    %vm919 = vmor %vm917, %vm918
    %v920 = vsel %vm919, %v912, %v916
    %v921 = vand.u32 2147483647, %v896
    %vm922 = vcmp.eq.f32.partialorder %v921, 8.507059e+37
    %v923 = vand.u32 %v896, 2147483648
    %v924 = vor.u32 1.1754944e-38, %v923
    %v925 = vsel %vm922, %v924, %v920
    %v926 = vmul.f32 1.0, %v925
    %v927 = vtanh.pop %v887
    %v928 = vmul.f32 %v911, %v734
    %930 = vrot.lane.b32.xlu0 %v927, 64
    %v931 = vpop.permute.xlu0 %930
    %v933 = vmul.f32 %v911, %v931
    %935 = vrot.lane.b32.xlu0 %v933, 64
    %v936 = vpop.permute.xlu0 %935
    %v938 = vadd.f32 %v928, %v936
    %v939 = vtanh.pop %v938
    %941 = vrot.lane.b32.xlu0 %v939, 64
    %v942 = vpop.permute.xlu0 %941
    %v944 = vmul.f32 %v926, %v942
    %v945 = vld [vmem:[#allocation2 + $0x20] sm:$0xff]
    %v946 = vld [vmem:[#allocation2 + $0x28] sm:$0xff]
    %v948 = vsel %vm504, %v843, 0
    %950 = vmatpush.msra.mxu0 0.0
    %951 = vmatpush.msra.mxu0 0.0
    %952 = vmatpush.msra.mxu0 0.0
    %953 = vmatpush.msra.mxu0 0.0
    %954 = vmatpush.msra.mxu0 0.0
    %955 = vmatpush.msra.mxu0 0.0
    %956 = vmatpush.msra.mxu0 0.0
    %957 = vmatpush.msra.mxu0 0.0
    %958 = vmatpush.msra.mxu0 %v502
    %959 = vmatpush.msra.mxu0 %v500
    %960 = vmatpush.msra.mxu0 %v498
    %961 = vmatpush.msra.mxu0 %v496
    %962 = vmatpush.msra.mxu0 %v494
    %963 = vmatpush.msra.mxu0 %v492
    %964 = vmatpush.msra.mxu0 %v490
    %965 = vmatpush.msra.mxu0 %v488
    %966 = vmatmul.f32.gmra.mxu0 %v948
    %v967 = vpop.f32.mrf.mxu0
    %v968 = vadd.f32 0.0, %v967
    %969 = vdwg.mxu0
    %970 = vmatpush.msra.mxu0 0.0
    %971 = vmatpush.msra.mxu0 0.0
    %972 = vmatpush.msra.mxu0 0.0
    %973 = vmatpush.msra.mxu0 0.0
    %974 = vmatpush.msra.mxu0 0.0
    %975 = vmatpush.msra.mxu0 0.0
    %976 = vmatpush.msra.mxu0 0.0
    %977 = vmatpush.msra.mxu0 0.0
    %978 = vmatpush.msra.mxu0 %v503
    %979 = vmatpush.msra.mxu0 %v501
    %980 = vmatpush.msra.mxu0 %v499
    %981 = vmatpush.msra.mxu0 %v497
    %982 = vmatpush.msra.mxu0 %v495
    %983 = vmatpush.msra.mxu0 %v493
    %984 = vmatpush.msra.mxu0 %v491
    %985 = vmatpush.msra.mxu0 %v489
    %986 = vmatmul.f32.gmra.mxu0 %v948
    %v987 = vpop.f32.mrf.mxu0
    %v988 = vadd.f32 0.0, %v987
    %989 = vdwg.mxu0
    %v990 = vadd.f32 %v945, %v968
    %v991 = vadd.f32 %v946, %v988
    %v992 = vxor.u32 %v990, 2147483648
    %v993 = vxor.u32 %v991, 2147483648
    %v994 = vmul.f32 %v992, 1.442695
    %v995 = vpow.pop %v994
    %v996 = vmul.f32 %v993, 1.442695
    %v997 = vpow.pop %v996
    %v998 = vadd.f32 %v995, 1.0
    %v999 = vadd.f32 %v997, 1.0
    %v1000 = vrcp.pop %v998
    %v1001 = vmul.f32 %v998, %v1000
    %v1002 = vsub.f32 1.0, %v1001
    %v1003 = vmul.f32 %v1000, %v1002
    %v1004 = vadd.f32 %v1000, %v1003
    %vm1005 = vweird.f32 %v998
    %vm1006 = vweird.f32 %v1000
    %vm1007 = vmor %vm1005, %vm1006
    %v1008 = vsel %vm1007, %v1000, %v1004
    %v1009 = vand.u32 2147483647, %v998
    %vm1010 = vcmp.eq.f32.partialorder %v1009, 8.507059e+37
    %v1011 = vand.u32 %v998, 2147483648
    %v1012 = vor.u32 1.1754944e-38, %v1011
    %v1013 = vsel %vm1010, %v1012, %v1008
    %v1014 = vmul.f32 1.0, %v1013
    %v1015 = vrcp.pop %v999
    %v1016 = vmul.f32 %v999, %v1015
    %v1017 = vsub.f32 1.0, %v1016
    %v1018 = vmul.f32 %v1015, %v1017
    %v1019 = vadd.f32 %v1015, %v1018
    %vm1020 = vweird.f32 %v999
    %vm1021 = vweird.f32 %v1015
    %vm1022 = vmor %vm1020, %vm1021
    %v1023 = vsel %vm1022, %v1015, %v1019
    %v1024 = vand.u32 2147483647, %v999
    %vm1025 = vcmp.eq.f32.partialorder %v1024, 8.507059e+37
    %v1026 = vand.u32 %v999, 2147483648
    %v1027 = vor.u32 1.1754944e-38, %v1026
    %v1028 = vsel %vm1025, %v1027, %v1023
    %v1029 = vmul.f32 1.0, %v1028
    %v1030 = vtanh.pop %v991
    %v1031 = vmul.f32 %v1014, %v837
    %1033 = vrot.lane.b32.xlu0 %v1030, 64
    %v1034 = vpop.permute.xlu0 %1033
    %v1036 = vmul.f32 %v1014, %v1034
    %1038 = vrot.lane.b32.xlu0 %v1036, 64
    %v1039 = vpop.permute.xlu0 %1038
    %v1041 = vadd.f32 %v1031, %v1039
    %v1042 = vtanh.pop %v1041
    %1044 = vrot.lane.b32.xlu0 %v1042, 64
    %v1045 = vpop.permute.xlu0 %1044
    %v1047 = vmul.f32 %v1029, %v1045
    %1049 = vrot.lane.b32.xlu0 %v944, 64
    %v1050 = vpop.permute.xlu0 %1049
    %v1052 = vsel %vm504, %v1047, %v1050
    %1053 = vmatpush.msra.mxu0 %v637
    %1054 = vmatpush.msra.mxu0 %v635
    %1055 = vmatpush.msra.mxu0 %v633
    %1056 = vmatpush.msra.mxu0 %v631
    %1057 = vmatpush.msra.mxu0 %v629
    %1058 = vmatpush.msra.mxu0 %v627
    %1059 = vmatpush.msra.mxu0 %v625
    %1060 = vmatpush.msra.mxu0 %v623
    %1061 = vmatpush.msra.mxu0 %v621
    %1062 = vmatpush.msra.mxu0 %v619
    %1063 = vmatpush.msra.mxu0 %v617
    %1064 = vmatpush.msra.mxu0 %v615
    %1065 = vmatpush.msra.mxu0 %v613
    %1066 = vmatpush.msra.mxu0 %v611
    %1067 = vmatpush.msra.mxu0 %v609
    %1068 = vmatpush.msra.mxu0 %v607
    %1069 = vmatmul.f32.gmra.mxu0 %v1052
    %v1070 = vpop.f32.mrf.mxu0
    %v1071 = vadd.f32 %v641, %v1070
    %1072 = vdwg.mxu0
    %1073 = vmatpush.msra.mxu0 %v638
    %1074 = vmatpush.msra.mxu0 %v636
    %1075 = vmatpush.msra.mxu0 %v634
    %1076 = vmatpush.msra.mxu0 %v632
    %1077 = vmatpush.msra.mxu0 %v630
    %1078 = vmatpush.msra.mxu0 %v628
    %1079 = vmatpush.msra.mxu0 %v626
    %1080 = vmatpush.msra.mxu0 %v624
    %1081 = vmatpush.msra.mxu0 %v622
    %1082 = vmatpush.msra.mxu0 %v620
    %1083 = vmatpush.msra.mxu0 %v618
    %1084 = vmatpush.msra.mxu0 %v616
    %1085 = vmatpush.msra.mxu0 %v614
    %1086 = vmatpush.msra.mxu0 %v612
    %1087 = vmatpush.msra.mxu0 %v610
    %1088 = vmatpush.msra.mxu0 %v608
    %1089 = vmatmul.f32.gmra.mxu0 %v1052
    %v1090 = vpop.f32.mrf.mxu0
    %v1091 = vadd.f32 %v642, %v1090
    %1092 = vdwg.mxu0
    %v1093 = vxor.u32 %v1071, 2147483648
    %v1094 = vxor.u32 %v1091, 2147483648
    %v1095 = vmul.f32 %v1093, 1.442695
    %v1096 = vpow.pop %v1095
    %v1097 = vmul.f32 %v1094, 1.442695
    %v1098 = vpow.pop %v1097
    %v1099 = vadd.f32 %v1096, 1.0
    %v1100 = vadd.f32 %v1098, 1.0
    %v1101 = vrcp.pop %v1099
    %v1102 = vmul.f32 %v1099, %v1101
    %v1103 = vsub.f32 1.0, %v1102
    %v1104 = vmul.f32 %v1101, %v1103
    %v1105 = vadd.f32 %v1101, %v1104
    %vm1106 = vweird.f32 %v1099
    %vm1107 = vweird.f32 %v1101
    %vm1108 = vmor %vm1106, %vm1107
    %v1109 = vsel %vm1108, %v1101, %v1105
    %v1110 = vand.u32 2147483647, %v1099
    %vm1111 = vcmp.eq.f32.partialorder %v1110, 8.507059e+37
    %v1112 = vand.u32 %v1099, 2147483648
    %v1113 = vor.u32 1.1754944e-38, %v1112
    %v1114 = vsel %vm1111, %v1113, %v1109
    %v1115 = vmul.f32 1.0, %v1114
    %v1116 = vrcp.pop %v1100
    %v1117 = vmul.f32 %v1100, %v1116
    %v1118 = vsub.f32 1.0, %v1117
    %v1119 = vmul.f32 %v1116, %v1118
    %v1120 = vadd.f32 %v1116, %v1119
    %vm1121 = vweird.f32 %v1100
    %vm1122 = vweird.f32 %v1116
    %vm1123 = vmor %vm1121, %vm1122
    %v1124 = vsel %vm1123, %v1116, %v1120
    %v1125 = vand.u32 2147483647, %v1100
    %vm1126 = vcmp.eq.f32.partialorder %v1125, 8.507059e+37
    %v1127 = vand.u32 %v1100, 2147483648
    %v1128 = vor.u32 1.1754944e-38, %v1127
    %v1129 = vsel %vm1126, %v1128, %v1124
    %v1130 = vmul.f32 1.0, %v1129
    %v1131 = vtanh.pop %v1091
    %v1132 = vmul.f32 %v1115, %v938
    %1134 = vrot.lane.b32.xlu0 %v1131, 64
    %v1135 = vpop.permute.xlu0 %1134
    %v1137 = vmul.f32 %v1115, %v1135
    %1139 = vrot.lane.b32.xlu0 %v1137, 64
    %v1140 = vpop.permute.xlu0 %1139
    %v1142 = vadd.f32 %v1132, %v1140
    %v1143 = vtanh.pop %v1142
    %1145 = vrot.lane.b32.xlu0 %v1143, 64
    %v1146 = vpop.permute.xlu0 %1145
    %v1148 = vmul.f32 %v1130, %v1146
    %v1149 = vld [vmem:[#allocation2 + $0x30] sm:$0xff]
    %v1150 = vld [vmem:[#allocation2 + $0x38] sm:$0xff]
    %v1152 = vsel %vm504, %v1047, 0
    %1154 = vmatpush.msra.mxu0 0.0
    %1155 = vmatpush.msra.mxu0 0.0
    %1156 = vmatpush.msra.mxu0 0.0
    %1157 = vmatpush.msra.mxu0 0.0
    %1158 = vmatpush.msra.mxu0 0.0
    %1159 = vmatpush.msra.mxu0 0.0
    %1160 = vmatpush.msra.mxu0 0.0
    %1161 = vmatpush.msra.mxu0 0.0
    %1162 = vmatpush.msra.mxu0 %v502
    %1163 = vmatpush.msra.mxu0 %v500
    %1164 = vmatpush.msra.mxu0 %v498
    %1165 = vmatpush.msra.mxu0 %v496
    %1166 = vmatpush.msra.mxu0 %v494
    %1167 = vmatpush.msra.mxu0 %v492
    %1168 = vmatpush.msra.mxu0 %v490
    %1169 = vmatpush.msra.mxu0 %v488
    %1170 = vmatmul.f32.gmra.mxu0 %v1152
    %v1171 = vpop.f32.mrf.mxu0
    %v1172 = vadd.f32 0.0, %v1171
    %1173 = vdwg.mxu0
    %1174 = vmatpush.msra.mxu0 0.0
    %1175 = vmatpush.msra.mxu0 0.0
    %1176 = vmatpush.msra.mxu0 0.0
    %1177 = vmatpush.msra.mxu0 0.0
    %1178 = vmatpush.msra.mxu0 0.0
    %1179 = vmatpush.msra.mxu0 0.0
    %1180 = vmatpush.msra.mxu0 0.0
    %1181 = vmatpush.msra.mxu0 0.0
    %1182 = vmatpush.msra.mxu0 %v503
    %1183 = vmatpush.msra.mxu0 %v501
    %1184 = vmatpush.msra.mxu0 %v499
    %1185 = vmatpush.msra.mxu0 %v497
    %1186 = vmatpush.msra.mxu0 %v495
    %1187 = vmatpush.msra.mxu0 %v493
    %1188 = vmatpush.msra.mxu0 %v491
    %1189 = vmatpush.msra.mxu0 %v489
    %1190 = vmatmul.f32.gmra.mxu0 %v1152
    %v1191 = vpop.f32.mrf.mxu0
    %v1192 = vadd.f32 0.0, %v1191
    %1193 = vdwg.mxu0
    %v1194 = vadd.f32 %v1149, %v1172
    %v1195 = vadd.f32 %v1150, %v1192
    %v1196 = vxor.u32 %v1194, 2147483648
    %v1197 = vxor.u32 %v1195, 2147483648
    %v1198 = vmul.f32 %v1196, 1.442695
    %v1199 = vpow.pop %v1198
    %v1200 = vmul.f32 %v1197, 1.442695
    %v1201 = vpow.pop %v1200
    %v1202 = vadd.f32 %v1199, 1.0
    %v1203 = vadd.f32 %v1201, 1.0
    %v1204 = vrcp.pop %v1202
    %v1205 = vmul.f32 %v1202, %v1204
    %v1206 = vsub.f32 1.0, %v1205
    %v1207 = vmul.f32 %v1204, %v1206
    %v1208 = vadd.f32 %v1204, %v1207
    %vm1209 = vweird.f32 %v1202
    %vm1210 = vweird.f32 %v1204
    %vm1211 = vmor %vm1209, %vm1210
    %v1212 = vsel %vm1211, %v1204, %v1208
    %v1213 = vand.u32 2147483647, %v1202
    %vm1214 = vcmp.eq.f32.partialorder %v1213, 8.507059e+37
    %v1215 = vand.u32 %v1202, 2147483648
    %v1216 = vor.u32 1.1754944e-38, %v1215
    %v1217 = vsel %vm1214, %v1216, %v1212
    %v1218 = vmul.f32 1.0, %v1217
    %v1219 = vrcp.pop %v1203
    %v1220 = vmul.f32 %v1203, %v1219
    %v1221 = vsub.f32 1.0, %v1220
    %v1222 = vmul.f32 %v1219, %v1221
    %v1223 = vadd.f32 %v1219, %v1222
    %vm1224 = vweird.f32 %v1203
    %vm1225 = vweird.f32 %v1219
    %vm1226 = vmor %vm1224, %vm1225
    %v1227 = vsel %vm1226, %v1219, %v1223
    %v1228 = vand.u32 2147483647, %v1203
    %vm1229 = vcmp.eq.f32.partialorder %v1228, 8.507059e+37
    %v1230 = vand.u32 %v1203, 2147483648
    %v1231 = vor.u32 1.1754944e-38, %v1230
    %v1232 = vsel %vm1229, %v1231, %v1227
    %v1233 = vmul.f32 1.0, %v1232
    %v1234 = vtanh.pop %v1195
    %v1235 = vmul.f32 %v1218, %v1041
    %1237 = vrot.lane.b32.xlu0 %v1234, 64
    %v1238 = vpop.permute.xlu0 %1237
    %v1240 = vmul.f32 %v1218, %v1238
    %1242 = vrot.lane.b32.xlu0 %v1240, 64
    %v1243 = vpop.permute.xlu0 %1242
    %v1245 = vadd.f32 %v1235, %v1243
    %v1246 = vtanh.pop %v1245
    %1248 = vrot.lane.b32.xlu0 %v1246, 64
    %v1249 = vpop.permute.xlu0 %1248
    %v1251 = vmul.f32 %v1233, %v1249
    %1253 = vrot.lane.b32.xlu0 %v1148, 64
    %v1254 = vpop.permute.xlu0 %1253
    %v1256 = vsel %vm504, %v1251, %v1254
    %1257 = vmatpush.msra.mxu0 %v637
    %1258 = vmatpush.msra.mxu0 %v635
    %1259 = vmatpush.msra.mxu0 %v633
    %1260 = vmatpush.msra.mxu0 %v631
    %1261 = vmatpush.msra.mxu0 %v629
    %1262 = vmatpush.msra.mxu0 %v627
    %1263 = vmatpush.msra.mxu0 %v625
    %1264 = vmatpush.msra.mxu0 %v623
    %1265 = vmatpush.msra.mxu0 %v621
    %1266 = vmatpush.msra.mxu0 %v619
    %1267 = vmatpush.msra.mxu0 %v617
    %1268 = vmatpush.msra.mxu0 %v615
    %1269 = vmatpush.msra.mxu0 %v613
    %1270 = vmatpush.msra.mxu0 %v611
    %1271 = vmatpush.msra.mxu0 %v609
    %1272 = vmatpush.msra.mxu0 %v607
    %1273 = vmatmul.f32.gmra.mxu0 %v1256
    %v1274 = vpop.f32.mrf.mxu0
    %v1275 = vadd.f32 %v641, %v1274
    %1276 = vdwg.mxu0
    %1277 = vmatpush.msra.mxu0 %v638
    %1278 = vmatpush.msra.mxu0 %v636
    %1279 = vmatpush.msra.mxu0 %v634
    %1280 = vmatpush.msra.mxu0 %v632
    %1281 = vmatpush.msra.mxu0 %v630
    %1282 = vmatpush.msra.mxu0 %v628
    %1283 = vmatpush.msra.mxu0 %v626
    %1284 = vmatpush.msra.mxu0 %v624
    %1285 = vmatpush.msra.mxu0 %v622
    %1286 = vmatpush.msra.mxu0 %v620
    %1287 = vmatpush.msra.mxu0 %v618
    %1288 = vmatpush.msra.mxu0 %v616
    %1289 = vmatpush.msra.mxu0 %v614
    %1290 = vmatpush.msra.mxu0 %v612
    %1291 = vmatpush.msra.mxu0 %v610
    %1292 = vmatpush.msra.mxu0 %v608
    %1293 = vmatmul.f32.gmra.mxu0 %v1256
    %v1294 = vpop.f32.mrf.mxu0
    %v1295 = vadd.f32 %v642, %v1294
    %1296 = vdwg.mxu0
    %v1297 = vxor.u32 %v1275, 2147483648
    %v1298 = vxor.u32 %v1295, 2147483648
    %v1299 = vmul.f32 %v1297, 1.442695
    %v1300 = vpow.pop %v1299
    %v1301 = vmul.f32 %v1298, 1.442695
    %v1302 = vpow.pop %v1301
    %v1303 = vadd.f32 %v1300, 1.0
    %v1304 = vadd.f32 %v1302, 1.0
    %v1305 = vrcp.pop %v1303
    %v1306 = vmul.f32 %v1303, %v1305
    %v1307 = vsub.f32 1.0, %v1306
    %v1308 = vmul.f32 %v1305, %v1307
    %v1309 = vadd.f32 %v1305, %v1308
    %vm1310 = vweird.f32 %v1303
    %vm1311 = vweird.f32 %v1305
    %vm1312 = vmor %vm1310, %vm1311
    %v1313 = vsel %vm1312, %v1305, %v1309
    %v1314 = vand.u32 2147483647, %v1303
    %vm1315 = vcmp.eq.f32.partialorder %v1314, 8.507059e+37
    %v1316 = vand.u32 %v1303, 2147483648
    %v1317 = vor.u32 1.1754944e-38, %v1316
    %v1318 = vsel %vm1315, %v1317, %v1313
    %v1319 = vmul.f32 1.0, %v1318
    %v1320 = vrcp.pop %v1304
    %v1321 = vmul.f32 %v1304, %v1320
    %v1322 = vsub.f32 1.0, %v1321
    %v1323 = vmul.f32 %v1320, %v1322
    %v1324 = vadd.f32 %v1320, %v1323
    %vm1325 = vweird.f32 %v1304
    %vm1326 = vweird.f32 %v1320
    %vm1327 = vmor %vm1325, %vm1326
    %v1328 = vsel %vm1327, %v1320, %v1324
    %v1329 = vand.u32 2147483647, %v1304
    %vm1330 = vcmp.eq.f32.partialorder %v1329, 8.507059e+37
    %v1331 = vand.u32 %v1304, 2147483648
    %v1332 = vor.u32 1.1754944e-38, %v1331
    %v1333 = vsel %vm1330, %v1332, %v1328
    %v1334 = vmul.f32 1.0, %v1333
    %v1335 = vtanh.pop %v1295
    %v1336 = vmul.f32 %v1319, %v1142
    %1338 = vrot.lane.b32.xlu0 %v1335, 64
    %v1339 = vpop.permute.xlu0 %1338
    %v1341 = vmul.f32 %v1319, %v1339
    %1343 = vrot.lane.b32.xlu0 %v1341, 64
    %v1344 = vpop.permute.xlu0 %1343
    %v1346 = vadd.f32 %v1336, %v1344
    %v1347 = vtanh.pop %v1346
    %1349 = vrot.lane.b32.xlu0 %v1347, 64
    %v1350 = vpop.permute.xlu0 %1349
    %v1352 = vmul.f32 %v1334, %v1350
    %v1353 = vld [vmem:[#allocation2 + $0x40] sm:$0xff]
    %v1354 = vld [vmem:[#allocation2 + $0x48] sm:$0xff]
    %v1356 = vsel %vm504, %v1251, 0
    %1358 = vmatpush.msra.mxu0 0.0
    %1359 = vmatpush.msra.mxu0 0.0
    %1360 = vmatpush.msra.mxu0 0.0
    %1361 = vmatpush.msra.mxu0 0.0
    %1362 = vmatpush.msra.mxu0 0.0
    %1363 = vmatpush.msra.mxu0 0.0
    %1364 = vmatpush.msra.mxu0 0.0
    %1365 = vmatpush.msra.mxu0 0.0
    %1366 = vmatpush.msra.mxu0 %v502
    %1367 = vmatpush.msra.mxu0 %v500
    %1368 = vmatpush.msra.mxu0 %v498
    %1369 = vmatpush.msra.mxu0 %v496
    %1370 = vmatpush.msra.mxu0 %v494
    %1371 = vmatpush.msra.mxu0 %v492
    %1372 = vmatpush.msra.mxu0 %v490
    %1373 = vmatpush.msra.mxu0 %v488
    %1374 = vmatmul.f32.gmra.mxu0 %v1356
    %v1375 = vpop.f32.mrf.mxu0
    %v1376 = vadd.f32 0.0, %v1375
    %1377 = vdwg.mxu0
    %1378 = vmatpush.msra.mxu0 0.0
    %1379 = vmatpush.msra.mxu0 0.0
    %1380 = vmatpush.msra.mxu0 0.0
    %1381 = vmatpush.msra.mxu0 0.0
    %1382 = vmatpush.msra.mxu0 0.0
    %1383 = vmatpush.msra.mxu0 0.0
    %1384 = vmatpush.msra.mxu0 0.0
    %1385 = vmatpush.msra.mxu0 0.0
    %1386 = vmatpush.msra.mxu0 %v503
    %1387 = vmatpush.msra.mxu0 %v501
    %1388 = vmatpush.msra.mxu0 %v499
    %1389 = vmatpush.msra.mxu0 %v497
    %1390 = vmatpush.msra.mxu0 %v495
    %1391 = vmatpush.msra.mxu0 %v493
    %1392 = vmatpush.msra.mxu0 %v491
    %1393 = vmatpush.msra.mxu0 %v489
    %1394 = vmatmul.f32.gmra.mxu0 %v1356
    %v1395 = vpop.f32.mrf.mxu0
    %v1396 = vadd.f32 0.0, %v1395
    %1397 = vdwg.mxu0
    %v1398 = vadd.f32 %v1353, %v1376
    %v1399 = vadd.f32 %v1354, %v1396
    %v1400 = vxor.u32 %v1398, 2147483648
    %v1401 = vxor.u32 %v1399, 2147483648
    %v1402 = vmul.f32 %v1400, 1.442695
    %v1403 = vpow.pop %v1402
    %v1404 = vmul.f32 %v1401, 1.442695
    %v1405 = vpow.pop %v1404
    %v1406 = vadd.f32 %v1403, 1.0
    %v1407 = vadd.f32 %v1405, 1.0
    %v1408 = vrcp.pop %v1406
    %v1409 = vmul.f32 %v1406, %v1408
    %v1410 = vsub.f32 1.0, %v1409
    %v1411 = vmul.f32 %v1408, %v1410
    %v1412 = vadd.f32 %v1408, %v1411
    %vm1413 = vweird.f32 %v1406
    %vm1414 = vweird.f32 %v1408
    %vm1415 = vmor %vm1413, %vm1414
    %v1416 = vsel %vm1415, %v1408, %v1412
    %v1417 = vand.u32 2147483647, %v1406
    %vm1418 = vcmp.eq.f32.partialorder %v1417, 8.507059e+37
    %v1419 = vand.u32 %v1406, 2147483648
    %v1420 = vor.u32 1.1754944e-38, %v1419
    %v1421 = vsel %vm1418, %v1420, %v1416
    %v1422 = vmul.f32 1.0, %v1421
    %v1423 = vrcp.pop %v1407
    %v1424 = vmul.f32 %v1407, %v1423
    %v1425 = vsub.f32 1.0, %v1424
    %v1426 = vmul.f32 %v1423, %v1425
    %v1427 = vadd.f32 %v1423, %v1426
    %vm1428 = vweird.f32 %v1407
    %vm1429 = vweird.f32 %v1423
    %vm1430 = vmor %vm1428, %vm1429
    %v1431 = vsel %vm1430, %v1423, %v1427
    %v1432 = vand.u32 2147483647, %v1407
    %vm1433 = vcmp.eq.f32.partialorder %v1432, 8.507059e+37
    %v1434 = vand.u32 %v1407, 2147483648
    %v1435 = vor.u32 1.1754944e-38, %v1434
    %v1436 = vsel %vm1433, %v1435, %v1431
    %v1437 = vmul.f32 1.0, %v1436
    %v1438 = vtanh.pop %v1399
    %v1439 = vmul.f32 %v1422, %v1245
    %1441 = vrot.lane.b32.xlu0 %v1438, 64
    %v1442 = vpop.permute.xlu0 %1441
    %v1444 = vmul.f32 %v1422, %v1442
    %1446 = vrot.lane.b32.xlu0 %v1444, 64
    %v1447 = vpop.permute.xlu0 %1446
    %v1449 = vadd.f32 %v1439, %v1447
    %v1450 = vtanh.pop %v1449
    %1452 = vrot.lane.b32.xlu0 %v1450, 64
    %v1453 = vpop.permute.xlu0 %1452
    %v1455 = vmul.f32 %v1437, %v1453
    %1457 = vrot.lane.b32.xlu0 %v1352, 64
    %v1458 = vpop.permute.xlu0 %1457
    %v1460 = vsel %vm504, %v1455, %v1458
    %1461 = vmatpush.msra.mxu0 %v637
    %1462 = vmatpush.msra.mxu0 %v635
    %1463 = vmatpush.msra.mxu0 %v633
    %1464 = vmatpush.msra.mxu0 %v631
    %1465 = vmatpush.msra.mxu0 %v629
    %1466 = vmatpush.msra.mxu0 %v627
    %1467 = vmatpush.msra.mxu0 %v625
    %1468 = vmatpush.msra.mxu0 %v623
    %1469 = vmatpush.msra.mxu0 %v621
    %1470 = vmatpush.msra.mxu0 %v619
    %1471 = vmatpush.msra.mxu0 %v617
    %1472 = vmatpush.msra.mxu0 %v615
    %1473 = vmatpush.msra.mxu0 %v613
    %1474 = vmatpush.msra.mxu0 %v611
    %1475 = vmatpush.msra.mxu0 %v609
    %1476 = vmatpush.msra.mxu0 %v607
    %1477 = vmatmul.f32.gmra.mxu0 %v1460
    %v1478 = vpop.f32.mrf.mxu0
    %v1479 = vadd.f32 %v641, %v1478
    %1480 = vdwg.mxu0
    %1481 = vmatpush.msra.mxu0 %v638
    %1482 = vmatpush.msra.mxu0 %v636
    %1483 = vmatpush.msra.mxu0 %v634
    %1484 = vmatpush.msra.mxu0 %v632
    %1485 = vmatpush.msra.mxu0 %v630
    %1486 = vmatpush.msra.mxu0 %v628
    %1487 = vmatpush.msra.mxu0 %v626
    %1488 = vmatpush.msra.mxu0 %v624
    %1489 = vmatpush.msra.mxu0 %v622
    %1490 = vmatpush.msra.mxu0 %v620
    %1491 = vmatpush.msra.mxu0 %v618
    %1492 = vmatpush.msra.mxu0 %v616
    %1493 = vmatpush.msra.mxu0 %v614
    %1494 = vmatpush.msra.mxu0 %v612
    %1495 = vmatpush.msra.mxu0 %v610
    %1496 = vmatpush.msra.mxu0 %v608
    %1497 = vmatmul.f32.gmra.mxu0 %v1460
    %v1498 = vpop.f32.mrf.mxu0
    %v1499 = vadd.f32 %v642, %v1498
    %1500 = vdwg.mxu0
    %v1501 = vxor.u32 %v1479, 2147483648
    %v1502 = vxor.u32 %v1499, 2147483648
    %v1503 = vmul.f32 %v1501, 1.442695
    %v1504 = vpow.pop %v1503
    %v1505 = vmul.f32 %v1502, 1.442695
    %v1506 = vpow.pop %v1505
    %v1507 = vadd.f32 %v1504, 1.0
    %v1508 = vadd.f32 %v1506, 1.0
    %v1509 = vrcp.pop %v1507
    %v1510 = vmul.f32 %v1507, %v1509
    %v1511 = vsub.f32 1.0, %v1510
    %v1512 = vmul.f32 %v1509, %v1511
    %v1513 = vadd.f32 %v1509, %v1512
    %vm1514 = vweird.f32 %v1507
    %vm1515 = vweird.f32 %v1509
    %vm1516 = vmor %vm1514, %vm1515
    %v1517 = vsel %vm1516, %v1509, %v1513
    %v1518 = vand.u32 2147483647, %v1507
    %vm1519 = vcmp.eq.f32.partialorder %v1518, 8.507059e+37
    %v1520 = vand.u32 %v1507, 2147483648
    %v1521 = vor.u32 1.1754944e-38, %v1520
    %v1522 = vsel %vm1519, %v1521, %v1517
    %v1523 = vmul.f32 1.0, %v1522
    %v1524 = vrcp.pop %v1508
    %v1525 = vmul.f32 %v1508, %v1524
    %v1526 = vsub.f32 1.0, %v1525
    %v1527 = vmul.f32 %v1524, %v1526
    %v1528 = vadd.f32 %v1524, %v1527
    %vm1529 = vweird.f32 %v1508
    %vm1530 = vweird.f32 %v1524
    %vm1531 = vmor %vm1529, %vm1530
    %v1532 = vsel %vm1531, %v1524, %v1528
    %v1533 = vand.u32 2147483647, %v1508
    %vm1534 = vcmp.eq.f32.partialorder %v1533, 8.507059e+37
    %v1535 = vand.u32 %v1508, 2147483648
    %v1536 = vor.u32 1.1754944e-38, %v1535
    %v1537 = vsel %vm1534, %v1536, %v1532
    %v1538 = vmul.f32 1.0, %v1537
    %v1539 = vtanh.pop %v1499
    %v1540 = vmul.f32 %v1523, %v1346
    %1542 = vrot.lane.b32.xlu0 %v1539, 64
    %v1543 = vpop.permute.xlu0 %1542
    %v1545 = vmul.f32 %v1523, %v1543
    %1547 = vrot.lane.b32.xlu0 %v1545, 64
    %v1548 = vpop.permute.xlu0 %1547
    %v1550 = vadd.f32 %v1540, %v1548
    %v1551 = vtanh.pop %v1550
    %1553 = vrot.lane.b32.xlu0 %v1551, 64
    %v1554 = vpop.permute.xlu0 %1553
    %v1556 = vmul.f32 %v1538, %v1554
    %v1557 = vld [vmem:[#allocation2 + $0x50] sm:$0xff]
    %v1558 = vld [vmem:[#allocation2 + $0x58] sm:$0xff]
    %v1560 = vsel %vm504, %v1455, 0
    %1562 = vmatpush.msra.mxu0 0.0
    %1563 = vmatpush.msra.mxu0 0.0
    %1564 = vmatpush.msra.mxu0 0.0
    %1565 = vmatpush.msra.mxu0 0.0
    %1566 = vmatpush.msra.mxu0 0.0
    %1567 = vmatpush.msra.mxu0 0.0
    %1568 = vmatpush.msra.mxu0 0.0
    %1569 = vmatpush.msra.mxu0 0.0
    %1570 = vmatpush.msra.mxu0 %v502
    %1571 = vmatpush.msra.mxu0 %v500
    %1572 = vmatpush.msra.mxu0 %v498
    %1573 = vmatpush.msra.mxu0 %v496
    %1574 = vmatpush.msra.mxu0 %v494
    %1575 = vmatpush.msra.mxu0 %v492
    %1576 = vmatpush.msra.mxu0 %v490
    %1577 = vmatpush.msra.mxu0 %v488
    %1578 = vmatmul.f32.gmra.mxu0 %v1560
    %v1579 = vpop.f32.mrf.mxu0
    %v1580 = vadd.f32 0.0, %v1579
    %1581 = vdwg.mxu0
    %1582 = vmatpush.msra.mxu0 0.0
    %1583 = vmatpush.msra.mxu0 0.0
    %1584 = vmatpush.msra.mxu0 0.0
    %1585 = vmatpush.msra.mxu0 0.0
    %1586 = vmatpush.msra.mxu0 0.0
    %1587 = vmatpush.msra.mxu0 0.0
    %1588 = vmatpush.msra.mxu0 0.0
    %1589 = vmatpush.msra.mxu0 0.0
    %1590 = vmatpush.msra.mxu0 %v503
    %1591 = vmatpush.msra.mxu0 %v501
    %1592 = vmatpush.msra.mxu0 %v499
    %1593 = vmatpush.msra.mxu0 %v497
    %1594 = vmatpush.msra.mxu0 %v495
    %1595 = vmatpush.msra.mxu0 %v493
    %1596 = vmatpush.msra.mxu0 %v491
    %1597 = vmatpush.msra.mxu0 %v489
    %1598 = vmatmul.f32.gmra.mxu0 %v1560
    %v1599 = vpop.f32.mrf.mxu0
    %v1600 = vadd.f32 0.0, %v1599
    %1601 = vdwg.mxu0
    %v1602 = vadd.f32 %v1557, %v1580
    %v1603 = vadd.f32 %v1558, %v1600
    %v1604 = vxor.u32 %v1602, 2147483648
    %v1605 = vxor.u32 %v1603, 2147483648
    %v1606 = vmul.f32 %v1604, 1.442695
    %v1607 = vpow.pop %v1606
    %v1608 = vmul.f32 %v1605, 1.442695
    %v1609 = vpow.pop %v1608
    %v1610 = vadd.f32 %v1607, 1.0
    %v1611 = vadd.f32 %v1609, 1.0
    %v1612 = vrcp.pop %v1610
    %v1613 = vmul.f32 %v1610, %v1612
    %v1614 = vsub.f32 1.0, %v1613
    %v1615 = vmul.f32 %v1612, %v1614
    %v1616 = vadd.f32 %v1612, %v1615
    %vm1617 = vweird.f32 %v1610
    %vm1618 = vweird.f32 %v1612
    %vm1619 = vmor %vm1617, %vm1618
    %v1620 = vsel %vm1619, %v1612, %v1616
    %v1621 = vand.u32 2147483647, %v1610
    %vm1622 = vcmp.eq.f32.partialorder %v1621, 8.507059e+37
    %v1623 = vand.u32 %v1610, 2147483648
    %v1624 = vor.u32 1.1754944e-38, %v1623
    %v1625 = vsel %vm1622, %v1624, %v1620
    %v1626 = vmul.f32 1.0, %v1625
    %v1627 = vrcp.pop %v1611
    %v1628 = vmul.f32 %v1611, %v1627
    %v1629 = vsub.f32 1.0, %v1628
    %v1630 = vmul.f32 %v1627, %v1629
    %v1631 = vadd.f32 %v1627, %v1630
    %vm1632 = vweird.f32 %v1611
    %vm1633 = vweird.f32 %v1627
    %vm1634 = vmor %vm1632, %vm1633
    %v1635 = vsel %vm1634, %v1627, %v1631
    %v1636 = vand.u32 2147483647, %v1611
    %vm1637 = vcmp.eq.f32.partialorder %v1636, 8.507059e+37
    %v1638 = vand.u32 %v1611, 2147483648
    %v1639 = vor.u32 1.1754944e-38, %v1638
    %v1640 = vsel %vm1637, %v1639, %v1635
    %v1641 = vmul.f32 1.0, %v1640
    %v1642 = vtanh.pop %v1603
    %v1643 = vmul.f32 %v1626, %v1449
    %1645 = vrot.lane.b32.xlu0 %v1642, 64
    %v1646 = vpop.permute.xlu0 %1645
    %v1648 = vmul.f32 %v1626, %v1646
    %1650 = vrot.lane.b32.xlu0 %v1648, 64
    %v1651 = vpop.permute.xlu0 %1650
    %v1653 = vadd.f32 %v1643, %v1651
    %v1654 = vtanh.pop %v1653
    %1656 = vrot.lane.b32.xlu0 %v1654, 64
    %v1657 = vpop.permute.xlu0 %1656
    %v1659 = vmul.f32 %v1641, %v1657
    %1661 = vrot.lane.b32.xlu0 %v1556, 64
    %v1662 = vpop.permute.xlu0 %1661
    %v1664 = vsel %vm504, %v1659, %v1662
    %1665 = vmatpush.msra.mxu0 %v637
    %1666 = vmatpush.msra.mxu0 %v635
    %1667 = vmatpush.msra.mxu0 %v633
    %1668 = vmatpush.msra.mxu0 %v631
    %1669 = vmatpush.msra.mxu0 %v629
    %1670 = vmatpush.msra.mxu0 %v627
    %1671 = vmatpush.msra.mxu0 %v625
    %1672 = vmatpush.msra.mxu0 %v623
    %1673 = vmatpush.msra.mxu0 %v621
    %1674 = vmatpush.msra.mxu0 %v619
    %1675 = vmatpush.msra.mxu0 %v617
    %1676 = vmatpush.msra.mxu0 %v615
    %1677 = vmatpush.msra.mxu0 %v613
    %1678 = vmatpush.msra.mxu0 %v611
    %1679 = vmatpush.msra.mxu0 %v609
    %1680 = vmatpush.msra.mxu0 %v607
    %1681 = vmatmul.f32.gmra.mxu0 %v1664
    %v1682 = vpop.f32.mrf.mxu0
    %v1683 = vadd.f32 %v641, %v1682
    %1684 = vdwg.mxu0
    %1685 = vmatpush.msra.mxu0 %v638
    %1686 = vmatpush.msra.mxu0 %v636
    %1687 = vmatpush.msra.mxu0 %v634
    %1688 = vmatpush.msra.mxu0 %v632
    %1689 = vmatpush.msra.mxu0 %v630
    %1690 = vmatpush.msra.mxu0 %v628
    %1691 = vmatpush.msra.mxu0 %v626
    %1692 = vmatpush.msra.mxu0 %v624
    %1693 = vmatpush.msra.mxu0 %v622
    %1694 = vmatpush.msra.mxu0 %v620
    %1695 = vmatpush.msra.mxu0 %v618
    %1696 = vmatpush.msra.mxu0 %v616
    %1697 = vmatpush.msra.mxu0 %v614
    %1698 = vmatpush.msra.mxu0 %v612
    %1699 = vmatpush.msra.mxu0 %v610
    %1700 = vmatpush.msra.mxu0 %v608
    %1701 = vmatmul.f32.gmra.mxu0 %v1664
    %v1702 = vpop.f32.mrf.mxu0
    %v1703 = vadd.f32 %v642, %v1702
    %1704 = vdwg.mxu0
    %v1705 = vxor.u32 %v1683, 2147483648
    %v1706 = vxor.u32 %v1703, 2147483648
    %v1707 = vmul.f32 %v1705, 1.442695
    %v1708 = vpow.pop %v1707
    %v1709 = vmul.f32 %v1706, 1.442695
    %v1710 = vpow.pop %v1709
    %v1711 = vadd.f32 %v1708, 1.0
    %v1712 = vadd.f32 %v1710, 1.0
    %v1713 = vrcp.pop %v1711
    %v1714 = vmul.f32 %v1711, %v1713
    %v1715 = vsub.f32 1.0, %v1714
    %v1716 = vmul.f32 %v1713, %v1715
    %v1717 = vadd.f32 %v1713, %v1716
    %vm1718 = vweird.f32 %v1711
    %vm1719 = vweird.f32 %v1713
    %vm1720 = vmor %vm1718, %vm1719
    %v1721 = vsel %vm1720, %v1713, %v1717
    %v1722 = vand.u32 2147483647, %v1711
    %vm1723 = vcmp.eq.f32.partialorder %v1722, 8.507059e+37
    %v1724 = vand.u32 %v1711, 2147483648
    %v1725 = vor.u32 1.1754944e-38, %v1724
    %v1726 = vsel %vm1723, %v1725, %v1721
    %v1727 = vmul.f32 1.0, %v1726
    %v1728 = vrcp.pop %v1712
    %v1729 = vmul.f32 %v1712, %v1728
    %v1730 = vsub.f32 1.0, %v1729
    %v1731 = vmul.f32 %v1728, %v1730
    %v1732 = vadd.f32 %v1728, %v1731
    %vm1733 = vweird.f32 %v1712
    %vm1734 = vweird.f32 %v1728
    %vm1735 = vmor %vm1733, %vm1734
    %v1736 = vsel %vm1735, %v1728, %v1732
    %v1737 = vand.u32 2147483647, %v1712
    %vm1738 = vcmp.eq.f32.partialorder %v1737, 8.507059e+37
    %v1739 = vand.u32 %v1712, 2147483648
    %v1740 = vor.u32 1.1754944e-38, %v1739
    %v1741 = vsel %vm1738, %v1740, %v1736
    %v1742 = vmul.f32 1.0, %v1741
    %v1743 = vtanh.pop %v1703
    %v1744 = vmul.f32 %v1727, %v1550
    %1746 = vrot.lane.b32.xlu0 %v1743, 64
    %v1747 = vpop.permute.xlu0 %1746
    %v1749 = vmul.f32 %v1727, %v1747
    %1751 = vrot.lane.b32.xlu0 %v1749, 64
    %v1752 = vpop.permute.xlu0 %1751
    %v1754 = vadd.f32 %v1744, %v1752
    %v1755 = vtanh.pop %v1754
    %1757 = vrot.lane.b32.xlu0 %v1755, 64
    %v1758 = vpop.permute.xlu0 %1757
    %v1760 = vmul.f32 %v1742, %v1758
    %v1761 = vld [vmem:[#allocation2 + $0x60] sm:$0xff]
    %v1762 = vld [vmem:[#allocation2 + $0x68] sm:$0xff]
    %v1764 = vsel %vm504, %v1659, 0
    %1766 = vmatpush.msra.mxu0 0.0
    %1767 = vmatpush.msra.mxu0 0.0
    %1768 = vmatpush.msra.mxu0 0.0
    %1769 = vmatpush.msra.mxu0 0.0
    %1770 = vmatpush.msra.mxu0 0.0
    %1771 = vmatpush.msra.mxu0 0.0
    %1772 = vmatpush.msra.mxu0 0.0
    %1773 = vmatpush.msra.mxu0 0.0
    %1774 = vmatpush.msra.mxu0 %v502
    %1775 = vmatpush.msra.mxu0 %v500
    %1776 = vmatpush.msra.mxu0 %v498
    %1777 = vmatpush.msra.mxu0 %v496
    %1778 = vmatpush.msra.mxu0 %v494
    %1779 = vmatpush.msra.mxu0 %v492
    %1780 = vmatpush.msra.mxu0 %v490
    %1781 = vmatpush.msra.mxu0 %v488
    %1782 = vmatmul.f32.gmra.mxu0 %v1764
    %v1783 = vpop.f32.mrf.mxu0
    %v1784 = vadd.f32 0.0, %v1783
    %1785 = vdwg.mxu0
    %1786 = vmatpush.msra.mxu0 0.0
    %1787 = vmatpush.msra.mxu0 0.0
    %1788 = vmatpush.msra.mxu0 0.0
    %1789 = vmatpush.msra.mxu0 0.0
    %1790 = vmatpush.msra.mxu0 0.0
    %1791 = vmatpush.msra.mxu0 0.0
    %1792 = vmatpush.msra.mxu0 0.0
    %1793 = vmatpush.msra.mxu0 0.0
    %1794 = vmatpush.msra.mxu0 %v503
    %1795 = vmatpush.msra.mxu0 %v501
    %1796 = vmatpush.msra.mxu0 %v499
    %1797 = vmatpush.msra.mxu0 %v497
    %1798 = vmatpush.msra.mxu0 %v495
    %1799 = vmatpush.msra.mxu0 %v493
    %1800 = vmatpush.msra.mxu0 %v491
    %1801 = vmatpush.msra.mxu0 %v489
    %1802 = vmatmul.f32.gmra.mxu0 %v1764
    %v1803 = vpop.f32.mrf.mxu0
    %v1804 = vadd.f32 0.0, %v1803
    %1805 = vdwg.mxu0
    %v1806 = vadd.f32 %v1761, %v1784
    %v1807 = vadd.f32 %v1762, %v1804
    %v1808 = vxor.u32 %v1806, 2147483648
    %v1809 = vxor.u32 %v1807, 2147483648
    %v1810 = vmul.f32 %v1808, 1.442695
    %v1811 = vpow.pop %v1810
    %v1812 = vmul.f32 %v1809, 1.442695
    %v1813 = vpow.pop %v1812
    %v1814 = vadd.f32 %v1811, 1.0
    %v1815 = vadd.f32 %v1813, 1.0
    %v1816 = vrcp.pop %v1814
    %v1817 = vmul.f32 %v1814, %v1816
    %v1818 = vsub.f32 1.0, %v1817
    %v1819 = vmul.f32 %v1816, %v1818
    %v1820 = vadd.f32 %v1816, %v1819
    %vm1821 = vweird.f32 %v1814
    %vm1822 = vweird.f32 %v1816
    %vm1823 = vmor %vm1821, %vm1822
    %v1824 = vsel %vm1823, %v1816, %v1820
    %v1825 = vand.u32 2147483647, %v1814
    %vm1826 = vcmp.eq.f32.partialorder %v1825, 8.507059e+37
    %v1827 = vand.u32 %v1814, 2147483648
    %v1828 = vor.u32 1.1754944e-38, %v1827
    %v1829 = vsel %vm1826, %v1828, %v1824
    %v1830 = vmul.f32 1.0, %v1829
    %v1831 = vrcp.pop %v1815
    %v1832 = vmul.f32 %v1815, %v1831
    %v1833 = vsub.f32 1.0, %v1832
    %v1834 = vmul.f32 %v1831, %v1833
    %v1835 = vadd.f32 %v1831, %v1834
    %vm1836 = vweird.f32 %v1815
    %vm1837 = vweird.f32 %v1831
    %vm1838 = vmor %vm1836, %vm1837
    %v1839 = vsel %vm1838, %v1831, %v1835
    %v1840 = vand.u32 2147483647, %v1815
    %vm1841 = vcmp.eq.f32.partialorder %v1840, 8.507059e+37
    %v1842 = vand.u32 %v1815, 2147483648
    %v1843 = vor.u32 1.1754944e-38, %v1842
    %v1844 = vsel %vm1841, %v1843, %v1839
    %v1845 = vmul.f32 1.0, %v1844
    %v1846 = vtanh.pop %v1807
    %v1847 = vmul.f32 %v1830, %v1653
    %1849 = vrot.lane.b32.xlu0 %v1846, 64
    %v1850 = vpop.permute.xlu0 %1849
    %v1852 = vmul.f32 %v1830, %v1850
    %1854 = vrot.lane.b32.xlu0 %v1852, 64
    %v1855 = vpop.permute.xlu0 %1854
    %v1857 = vadd.f32 %v1847, %v1855
    %v1858 = vtanh.pop %v1857
    %1860 = vrot.lane.b32.xlu0 %v1858, 64
    %v1861 = vpop.permute.xlu0 %1860
    %v1863 = vmul.f32 %v1845, %v1861
    %1865 = vrot.lane.b32.xlu0 %v1760, 64
    %v1866 = vpop.permute.xlu0 %1865
    %v1868 = vsel %vm504, %v1863, %v1866
    %1869 = vmatpush.msra.mxu0 %v637
    %1870 = vmatpush.msra.mxu0 %v635
    %1871 = vmatpush.msra.mxu0 %v633
    %1872 = vmatpush.msra.mxu0 %v631
    %1873 = vmatpush.msra.mxu0 %v629
    %1874 = vmatpush.msra.mxu0 %v627
    %1875 = vmatpush.msra.mxu0 %v625
    %1876 = vmatpush.msra.mxu0 %v623
    %1877 = vmatpush.msra.mxu0 %v621
    %1878 = vmatpush.msra.mxu0 %v619
    %1879 = vmatpush.msra.mxu0 %v617
    %1880 = vmatpush.msra.mxu0 %v615
    %1881 = vmatpush.msra.mxu0 %v613
    %1882 = vmatpush.msra.mxu0 %v611
    %1883 = vmatpush.msra.mxu0 %v609
    %1884 = vmatpush.msra.mxu0 %v607
    %1885 = vmatmul.f32.gmra.mxu0 %v1868
    %v1886 = vpop.f32.mrf.mxu0
    %v1887 = vadd.f32 %v641, %v1886
    %1888 = vdwg.mxu0
    %1889 = vmatpush.msra.mxu0 %v638
    %1890 = vmatpush.msra.mxu0 %v636
    %1891 = vmatpush.msra.mxu0 %v634
    %1892 = vmatpush.msra.mxu0 %v632
    %1893 = vmatpush.msra.mxu0 %v630
    %1894 = vmatpush.msra.mxu0 %v628
    %1895 = vmatpush.msra.mxu0 %v626
    %1896 = vmatpush.msra.mxu0 %v624
    %1897 = vmatpush.msra.mxu0 %v622
    %1898 = vmatpush.msra.mxu0 %v620
    %1899 = vmatpush.msra.mxu0 %v618
    %1900 = vmatpush.msra.mxu0 %v616
    %1901 = vmatpush.msra.mxu0 %v614
    %1902 = vmatpush.msra.mxu0 %v612
    %1903 = vmatpush.msra.mxu0 %v610
    %1904 = vmatpush.msra.mxu0 %v608
    %1905 = vmatmul.f32.gmra.mxu0 %v1868
    %v1906 = vpop.f32.mrf.mxu0
    %v1907 = vadd.f32 %v642, %v1906
    %1908 = vdwg.mxu0
    %v1909 = vxor.u32 %v1887, 2147483648
    %v1910 = vxor.u32 %v1907, 2147483648
    %v1911 = vmul.f32 %v1909, 1.442695
    %v1912 = vpow.pop %v1911
    %v1913 = vmul.f32 %v1910, 1.442695
    %v1914 = vpow.pop %v1913
    %v1915 = vadd.f32 %v1912, 1.0
    %v1916 = vadd.f32 %v1914, 1.0
    %v1917 = vrcp.pop %v1915
    %v1918 = vmul.f32 %v1915, %v1917
    %v1919 = vsub.f32 1.0, %v1918
    %v1920 = vmul.f32 %v1917, %v1919
    %v1921 = vadd.f32 %v1917, %v1920
    %vm1922 = vweird.f32 %v1915
    %vm1923 = vweird.f32 %v1917
    %vm1924 = vmor %vm1922, %vm1923
    %v1925 = vsel %vm1924, %v1917, %v1921
    %v1926 = vand.u32 2147483647, %v1915
    %vm1927 = vcmp.eq.f32.partialorder %v1926, 8.507059e+37
    %v1928 = vand.u32 %v1915, 2147483648
    %v1929 = vor.u32 1.1754944e-38, %v1928
    %v1930 = vsel %vm1927, %v1929, %v1925
    %v1931 = vmul.f32 1.0, %v1930
    %v1932 = vrcp.pop %v1916
    %v1933 = vmul.f32 %v1916, %v1932
    %v1934 = vsub.f32 1.0, %v1933
    %v1935 = vmul.f32 %v1932, %v1934
    %v1936 = vadd.f32 %v1932, %v1935
    %vm1937 = vweird.f32 %v1916
    %vm1938 = vweird.f32 %v1932
    %vm1939 = vmor %vm1937, %vm1938
    %v1940 = vsel %vm1939, %v1932, %v1936
    %v1941 = vand.u32 2147483647, %v1916
    %vm1942 = vcmp.eq.f32.partialorder %v1941, 8.507059e+37
    %v1943 = vand.u32 %v1916, 2147483648
    %v1944 = vor.u32 1.1754944e-38, %v1943
    %v1945 = vsel %vm1942, %v1944, %v1940
    %v1946 = vmul.f32 1.0, %v1945
    %v1947 = vtanh.pop %v1907
    %v1948 = vmul.f32 %v1931, %v1754
    %1950 = vrot.lane.b32.xlu0 %v1947, 64
    %v1951 = vpop.permute.xlu0 %1950
    %v1953 = vmul.f32 %v1931, %v1951
    %1955 = vrot.lane.b32.xlu0 %v1953, 64
    %v1956 = vpop.permute.xlu0 %1955
    %v1958 = vadd.f32 %v1948, %v1956
    %v1959 = vtanh.pop %v1958
    %1961 = vrot.lane.b32.xlu0 %v1959, 64
    %v1962 = vpop.permute.xlu0 %1961
    %v1964 = vmul.f32 %v1946, %v1962
    %v1965 = vld [vmem:[#allocation2 + $0x70] sm:$0xff]
    %v1966 = vld [vmem:[#allocation2 + $0x78] sm:$0xff]
    %v1968 = vsel %vm504, %v1863, 0
    %1970 = vmatpush.msra.mxu0 0.0
    %1971 = vmatpush.msra.mxu0 0.0
    %1972 = vmatpush.msra.mxu0 0.0
    %1973 = vmatpush.msra.mxu0 0.0
    %1974 = vmatpush.msra.mxu0 0.0
    %1975 = vmatpush.msra.mxu0 0.0
    %1976 = vmatpush.msra.mxu0 0.0
    %1977 = vmatpush.msra.mxu0 0.0
    %1978 = vmatpush.msra.mxu0 %v502
    %1979 = vmatpush.msra.mxu0 %v500
    %1980 = vmatpush.msra.mxu0 %v498
    %1981 = vmatpush.msra.mxu0 %v496
    %1982 = vmatpush.msra.mxu0 %v494
    %1983 = vmatpush.msra.mxu0 %v492
    %1984 = vmatpush.msra.mxu0 %v490
    %1985 = vmatpush.msra.mxu0 %v488
    %1986 = vmatmul.f32.gmra.mxu0 %v1968
    %v1987 = vpop.f32.mrf.mxu0
    %v1988 = vadd.f32 0.0, %v1987
    %1989 = vdwg.mxu0
    %1990 = vmatpush.msra.mxu0 0.0
    %1991 = vmatpush.msra.mxu0 0.0
    %1992 = vmatpush.msra.mxu0 0.0
    %1993 = vmatpush.msra.mxu0 0.0
    %1994 = vmatpush.msra.mxu0 0.0
    %1995 = vmatpush.msra.mxu0 0.0
    %1996 = vmatpush.msra.mxu0 0.0
    %1997 = vmatpush.msra.mxu0 0.0
    %1998 = vmatpush.msra.mxu0 %v503
    %1999 = vmatpush.msra.mxu0 %v501
    %2000 = vmatpush.msra.mxu0 %v499
    %2001 = vmatpush.msra.mxu0 %v497
    %2002 = vmatpush.msra.mxu0 %v495
    %2003 = vmatpush.msra.mxu0 %v493
    %2004 = vmatpush.msra.mxu0 %v491
    %2005 = vmatpush.msra.mxu0 %v489
    %2006 = vmatmul.f32.gmra.mxu0 %v1968
    %v2007 = vpop.f32.mrf.mxu0
    %v2008 = vadd.f32 0.0, %v2007
    %2009 = vdwg.mxu0
    %v2010 = vadd.f32 %v1965, %v1988
    %v2011 = vadd.f32 %v1966, %v2008
    %v2012 = vxor.u32 %v2010, 2147483648
    %v2013 = vxor.u32 %v2011, 2147483648
    %v2014 = vmul.f32 %v2012, 1.442695
    %v2015 = vpow.pop %v2014
    %v2016 = vmul.f32 %v2013, 1.442695
    %v2017 = vpow.pop %v2016
    %v2018 = vadd.f32 %v2015, 1.0
    %v2019 = vadd.f32 %v2017, 1.0
    %v2020 = vrcp.pop %v2018
    %v2021 = vmul.f32 %v2018, %v2020
    %v2022 = vsub.f32 1.0, %v2021
    %v2023 = vmul.f32 %v2020, %v2022
    %v2024 = vadd.f32 %v2020, %v2023
    %vm2025 = vweird.f32 %v2018
    %vm2026 = vweird.f32 %v2020
    %vm2027 = vmor %vm2025, %vm2026
    %v2028 = vsel %vm2027, %v2020, %v2024
    %v2029 = vand.u32 2147483647, %v2018
    %vm2030 = vcmp.eq.f32.partialorder %v2029, 8.507059e+37
    %v2031 = vand.u32 %v2018, 2147483648
    %v2032 = vor.u32 1.1754944e-38, %v2031
    %v2033 = vsel %vm2030, %v2032, %v2028
    %v2034 = vmul.f32 1.0, %v2033
    %v2035 = vrcp.pop %v2019
    %v2036 = vmul.f32 %v2019, %v2035
    %v2037 = vsub.f32 1.0, %v2036
    %v2038 = vmul.f32 %v2035, %v2037
    %v2039 = vadd.f32 %v2035, %v2038
    %vm2040 = vweird.f32 %v2019
    %vm2041 = vweird.f32 %v2035
    %vm2042 = vmor %vm2040, %vm2041
    %v2043 = vsel %vm2042, %v2035, %v2039
    %v2044 = vand.u32 2147483647, %v2019
    %vm2045 = vcmp.eq.f32.partialorder %v2044, 8.507059e+37
    %v2046 = vand.u32 %v2019, 2147483648
    %v2047 = vor.u32 1.1754944e-38, %v2046
    %v2048 = vsel %vm2045, %v2047, %v2043
    %v2049 = vmul.f32 1.0, %v2048
    %v2050 = vtanh.pop %v2011
    %v2051 = vmul.f32 %v2034, %v1857
    %2053 = vrot.lane.b32.xlu0 %v2050, 64
    %v2054 = vpop.permute.xlu0 %2053
    %v2056 = vmul.f32 %v2034, %v2054
    %2058 = vrot.lane.b32.xlu0 %v2056, 64
    %v2059 = vpop.permute.xlu0 %2058
    %v2061 = vadd.f32 %v2051, %v2059
    %v2062 = vtanh.pop %v2061
    %2064 = vrot.lane.b32.xlu0 %v2062, 64
    %v2065 = vpop.permute.xlu0 %2064
    %v2067 = vmul.f32 %v2049, %v2065
    %2069 = vrot.lane.b32.xlu0 %v1964, 64
    %v2070 = vpop.permute.xlu0 %2069
    %v2072 = vsel %vm504, %v2067, %v2070
    %2073 = vmatpush.msra.mxu0 %v637
    %2074 = vmatpush.msra.mxu0 %v635
    %2075 = vmatpush.msra.mxu0 %v633
    %2076 = vmatpush.msra.mxu0 %v631
    %2077 = vmatpush.msra.mxu0 %v629
    %2078 = vmatpush.msra.mxu0 %v627
    %2079 = vmatpush.msra.mxu0 %v625
    %2080 = vmatpush.msra.mxu0 %v623
    %2081 = vmatpush.msra.mxu0 %v621
    %2082 = vmatpush.msra.mxu0 %v619
    %2083 = vmatpush.msra.mxu0 %v617
    %2084 = vmatpush.msra.mxu0 %v615
    %2085 = vmatpush.msra.mxu0 %v613
    %2086 = vmatpush.msra.mxu0 %v611
    %2087 = vmatpush.msra.mxu0 %v609
    %2088 = vmatpush.msra.mxu0 %v607
    %2089 = vmatmul.f32.gmra.mxu0 %v2072
    %v2090 = vpop.f32.mrf.mxu0
    %v2091 = vadd.f32 %v641, %v2090
    %2092 = vdwg.mxu0
    %2093 = vmatpush.msra.mxu0 %v638
    %2094 = vmatpush.msra.mxu0 %v636
    %2095 = vmatpush.msra.mxu0 %v634
    %2096 = vmatpush.msra.mxu0 %v632
    %2097 = vmatpush.msra.mxu0 %v630
    %2098 = vmatpush.msra.mxu0 %v628
    %2099 = vmatpush.msra.mxu0 %v626
    %2100 = vmatpush.msra.mxu0 %v624
    %2101 = vmatpush.msra.mxu0 %v622
    %2102 = vmatpush.msra.mxu0 %v620
    %2103 = vmatpush.msra.mxu0 %v618
    %2104 = vmatpush.msra.mxu0 %v616
    %2105 = vmatpush.msra.mxu0 %v614
    %2106 = vmatpush.msra.mxu0 %v612
    %2107 = vmatpush.msra.mxu0 %v610
    %2108 = vmatpush.msra.mxu0 %v608
    %2109 = vmatmul.f32.gmra.mxu0 %v2072
    %v2110 = vpop.f32.mrf.mxu0
    %v2111 = vadd.f32 %v642, %v2110
    %2112 = vdwg.mxu0
    %v2113 = vxor.u32 %v2091, 2147483648
    %v2114 = vxor.u32 %v2111, 2147483648
    %v2115 = vmul.f32 %v2113, 1.442695
    %v2116 = vpow.pop %v2115
    %v2117 = vmul.f32 %v2114, 1.442695
    %v2118 = vpow.pop %v2117
    %v2119 = vadd.f32 %v2116, 1.0
    %v2120 = vadd.f32 %v2118, 1.0
    %v2121 = vrcp.pop %v2119
    %v2122 = vmul.f32 %v2119, %v2121
    %v2123 = vsub.f32 1.0, %v2122
    %v2124 = vmul.f32 %v2121, %v2123
    %v2125 = vadd.f32 %v2121, %v2124
    %vm2126 = vweird.f32 %v2119
    %vm2127 = vweird.f32 %v2121
    %vm2128 = vmor %vm2126, %vm2127
    %v2129 = vsel %vm2128, %v2121, %v2125
    %v2130 = vand.u32 2147483647, %v2119
    %vm2131 = vcmp.eq.f32.partialorder %v2130, 8.507059e+37
    %v2132 = vand.u32 %v2119, 2147483648
    %v2133 = vor.u32 1.1754944e-38, %v2132
    %v2134 = vsel %vm2131, %v2133, %v2129
    %v2135 = vmul.f32 1.0, %v2134
    %v2136 = vrcp.pop %v2120
    %v2137 = vmul.f32 %v2120, %v2136
    %v2138 = vsub.f32 1.0, %v2137
    %v2139 = vmul.f32 %v2136, %v2138
    %v2140 = vadd.f32 %v2136, %v2139
    %vm2141 = vweird.f32 %v2120
    %vm2142 = vweird.f32 %v2136
    %vm2143 = vmor %vm2141, %vm2142
    %v2144 = vsel %vm2143, %v2136, %v2140
    %v2145 = vand.u32 2147483647, %v2120
    %vm2146 = vcmp.eq.f32.partialorder %v2145, 8.507059e+37
    %v2147 = vand.u32 %v2120, 2147483648
    %v2148 = vor.u32 1.1754944e-38, %v2147
    %v2149 = vsel %vm2146, %v2148, %v2144
    %v2150 = vmul.f32 1.0, %v2149
    %v2151 = vtanh.pop %v2111
    %v2152 = vmul.f32 %v2135, %v1958
    %2154 = vrot.lane.b32.xlu0 %v2151, 64
    %v2155 = vpop.permute.xlu0 %2154
    %v2157 = vmul.f32 %v2135, %v2155
    %2159 = vrot.lane.b32.xlu0 %v2157, 64
    %v2160 = vpop.permute.xlu0 %2159
    %v2162 = vadd.f32 %v2152, %v2160
    %v2163 = vtanh.pop %v2162
    %2165 = vrot.lane.b32.xlu0 %v2163, 64
    %v2166 = vpop.permute.xlu0 %2165
    %v2168 = vmul.f32 %v2150, %v2166
    %v2169 = vld [vmem:[%s6] sm:$0xff]
    %v2170 = vld [vmem:[%s6 + $0x8] sm:$0xff]
    %v2171 = vld [vmem:[%s6 + $0x10] sm:$0xff]
    %v2172 = vld [vmem:[%s6 + $0x18] sm:$0xff]
    %v2173 = vld [vmem:[%s6 + $0x20] sm:$0xff]
    %v2174 = vld [vmem:[%s6 + $0x28] sm:$0xff]
    %v2175 = vld [vmem:[%s6 + $0x30] sm:$0xff]
    %v2176 = vld [vmem:[%s6 + $0x38] sm:$0xff]
    %v2177 = vld [vmem:[%s7] sm:$0x1]
    %v2179 = vperm.slane %v2177, 0
    %v2182 = vsel %vm504, %v2168, 0
    %2184 = vmatpush.msra.mxu0 0.0
    %2185 = vmatpush.msra.mxu0 0.0
    %2186 = vmatpush.msra.mxu0 0.0
    %2187 = vmatpush.msra.mxu0 0.0
    %2188 = vmatpush.msra.mxu0 0.0
    %2189 = vmatpush.msra.mxu0 0.0
    %2190 = vmatpush.msra.mxu0 0.0
    %2191 = vmatpush.msra.mxu0 0.0
    %2192 = vmatpush.msra.mxu0 %v2176
    %2193 = vmatpush.msra.mxu0 %v2175
    %2194 = vmatpush.msra.mxu0 %v2174
    %2195 = vmatpush.msra.mxu0 %v2173
    %2196 = vmatpush.msra.mxu0 %v2172
    %2197 = vmatpush.msra.mxu0 %v2171
    %2198 = vmatpush.msra.mxu0 %v2170
    %2199 = vmatpush.msra.mxu0 %v2169
    %2200 = vmatmul.f32.gmra.mxu0 %v2182
    %v2201 = vpop.f32.mrf.mxu0
    %v2202 = vadd.f32 %v2179, %v2201
    %2203 = vdwg.mxu0
    %v2204 = vxor.u32 %v2202, 2147483648
    %v2205 = vmul.f32 %v2204, 1.442695
    %v2206 = vpow.pop %v2205
    %v2207 = vadd.f32 %v2206, 1.0
    %v2208 = vrcp.pop %v2207
    %v2209 = vmul.f32 %v2207, %v2208
    %v2210 = vsub.f32 1.0, %v2209
    %v2211 = vmul.f32 %v2208, %v2210
    %v2212 = vadd.f32 %v2208, %v2211
    %vm2213 = vweird.f32 %v2207
    %vm2214 = vweird.f32 %v2208
    %vm2215 = vmor %vm2213, %vm2214
    %v2216 = vsel %vm2215, %v2208, %v2212
    %v2217 = vand.u32 2147483647, %v2207
    %vm2218 = vcmp.eq.f32.partialorder %v2217, 8.507059e+37
    %v2219 = vand.u32 %v2207, 2147483648
    %v2220 = vor.u32 1.1754944e-38, %v2219
    %v2221 = vsel %vm2218, %v2220, %v2216
    %v2222 = vmul.f32 1.0, %v2221
    %vm2223 = vcmask 23552
    %2224 = vst.msk [vmem:[%s8] sm:$0xff] %vm2223, %v2222
    // Predicated region
    $region42: #{risk_sequence_model.1} parent=1 // pred_check
      _
    $region43: #{risk_sequence_model.1} parent=1 // pred_check_branch
      %2226 = sbr.rel (0) target = $region45
    $region44: #{risk_sequence_model.1} parent=1 // pred_region
      _
    $region45: #{risk_sequence_model.1} parent=1 // pred_fallthru
      _
    // Predicated region
    $region46: #{risk_sequence_model.1} parent=1 // pred_check
      _
    $region47: #{risk_sequence_model.1} parent=1 // pred_check_branch
      %2228 = sbr.rel (0) target = $region49
    $region48: #{risk_sequence_model.1} parent=1 // pred_region
      _
    $region49: #{risk_sequence_model.1} parent=1 // pred_fallthru
      _
    %2229 = vsyncpa [#allocation4], 1
    %2230 = vsyncpa [#allocation6], 1

</llo_original>
